<compile_context>
chip_gen: v7x
topology: tpu7x:2x2x1
jax: 0.10.0
libtpu: 0.0.40
codegen_flags: <defaults>
</compile_context>

<pallas_src>
import jax
import jax.numpy as jnp
from jax.experimental import pallas as pl
from jax.experimental.pallas import tpu as pltpu


def _bottleneck_kernel(x_hbm, x_ref, w1_ref, w2_ref, w3_ref,
                       s1_ref, b1_ref, s2_ref, b2_ref, s3_ref, b3_ref,
                       out_ref,
                       halo_ref, h1_ref, sem):
    n = pl.program_id(0)
    i = pl.program_id(1)
    nt = pl.num_programs(1)

    _, TH, W, Cin = x_ref.shape
    P = w1_ref.shape[1]
    Cout = w3_ref.shape[1]
    M = TH * W
    r0 = i * TH
    mm_dtype = w1_ref.dtype                       # bf16 matmul inputs

    # ---- kick off halo-row DMAs early (1 row above / below this tile) ------
    @pl.when(i > 0)
    def _():
        pltpu.make_async_copy(x_hbm.at[n, r0 - 1], halo_ref.at[0],
                              sem.at[0]).start()

    @pl.when(i < nt - 1)
    def _():
        pltpu.make_async_copy(x_hbm.at[n, r0 + TH], halo_ref.at[1],
                              sem.at[1]).start()

    # ---- hoisted folded-BN params: read once per grid step, kept in f32 ----
    s1, b1 = s1_ref[...], b1_ref[...]
    s2, b2 = s2_ref[...], b2_ref[...]
    s3, b3 = s3_ref[...], b3_ref[...]
    w1 = w1_ref[...]
    w3 = w3_ref[...]

    def conv1_bn_relu(x2d):                       # (rows, Cin) f32 -> (rows, P) f32
        h = jnp.dot(x2d.astype(mm_dtype), w1, preferred_element_type=jnp.float32)
        return jnp.maximum(h * s1 + b1, 0.0)

    # ---- conv1 (1x1, bias=False) + bn1 + relu on the TH interior rows ------
    x2d = x_ref[...].reshape(M, Cin)              # f32; also reused by residual
    h1_ref[1:TH + 1] = conv1_bn_relu(x2d).reshape(TH, W, P)

    # ---- halo rows of the conv2 input: zero padding outside the image,
    #      conv1(bn1(relu)) of the fetched x row inside it. -------------------
    @pl.when(i == 0)
    def _():
        h1_ref[0] = jnp.zeros((W, P), jnp.float32)

    @pl.when(i > 0)
    def _():
        pltpu.make_async_copy(x_hbm.at[n, r0 - 1], halo_ref.at[0],
                              sem.at[0]).wait()
        h1_ref[0] = conv1_bn_relu(halo_ref[0])

    @pl.when(i == nt - 1)
    def _():
        h1_ref[TH + 1] = jnp.zeros((W, P), jnp.float32)

    @pl.when(i < nt - 1)
    def _():
        pltpu.make_async_copy(x_hbm.at[n, r0 + TH], halo_ref.at[1],
                              sem.at[1]).wait()
        h1_ref[TH + 1] = conv1_bn_relu(halo_ref[1])

    # ---- conv2 (3x3, stride=1, pad=1, bias=False) + bn2 + relu --------------
    # One fat matmul per kernel row dy (K = 3P): the three column taps are
    # concatenated along channels.  The +-1 column shifts use static slices and
    # a single hoisted zero column (no negative roll, no iota masks); the three
    # taps accumulate in vector registers.
    zcol = jnp.zeros((TH, 1, P), jnp.float32)     # hoisted (JAX won't CSE it)
    acc = None
    for dy in range(3):                            # static, unrolled
        win = h1_ref[dy:dy + TH]                                    # (TH, W, P)
        left = jnp.concatenate([zcol, win[:, :W - 1, :]], axis=1)   # col x-1
        right = jnp.concatenate([win[:, 1:, :], zcol], axis=1)      # col x+1
        op = jnp.concatenate([left, win, right], axis=-1)           # (TH, W, 3P)
        tap = jnp.dot(op.reshape(M, 3 * P).astype(mm_dtype), w2_ref[dy],
                      preferred_element_type=jnp.float32)
        acc = tap if acc is None else acc + tap
    h2 = jnp.maximum(acc * s2 + b2, 0.0)

    # ---- conv3 (1x1, bias=False) + bn3 + identity residual + relu -----------
    h3 = jnp.dot(h2.astype(mm_dtype), w3, preferred_element_type=jnp.float32)
    h3 = h3 * s3 + b3
    out = jnp.maximum(h3 + x2d, 0.0)              # downsample is None: Cin == Cout
    out_ref[...] = out.reshape(1, TH, W, Cout)


def _pick_tile_h(H, W, Cin, P, budget_bytes=2 << 20):
    """Largest divisor of H whose per-step VMEM working set fits the budget
    (sized so double-buffered in/out tiles + scratch stay well inside v7x's
    smaller VMEM while keeping 2-deep pipelining)."""
    best = 1
    for th in range(1, H + 1):
        if H % th:
            continue
        per_step = (2 * th * W * Cin * 4        # x tile, double-buffered
                    + 2 * th * W * Cin * 4      # out tile, double-buffered
                    + (th + 2) * W * P * 4      # h1 scratch (row halo)
                    + th * W * 3 * P * 4)       # conv2 fat operand (in vregs/VMEM)
        if per_step <= budget_bytes:
            best = th
    return best


def bottleneck_forward(x_nchw, p, *, tile_h=None, matmul_dtype=jnp.bfloat16):
    """x_nchw: (N, C, H, W) float32. Returns (N, C, H, W) float32."""
    x = jnp.transpose(x_nchw, (0, 2, 3, 1)).astype(jnp.float32)    # -> NHWC
    N, H, W, Cin = x.shape
    P = p["w1"].shape[1]
    Cout = p["w3"].shape[1]
    assert Cin == Cout, "downsample=None requires in_planes == planes * 4"

    if tile_h is None:
        tile_h = _pick_tile_h(H, W, Cin, P)
    assert H % tile_h == 0, f"tile_h={tile_h} must divide H={H}"
    TH = tile_h

    # Weights are cast to bf16 once here; f32 accumulation happens in-kernel.
    w1 = p["w1"].astype(matmul_dtype)                        # (Cin, P)
    w2 = p["w2"].reshape(3, 3 * P, P).astype(matmul_dtype)   # per-dy (3P, P)
    w3 = p["w3"].astype(matmul_dtype)                        # (P, Cout)

    res = lambda n, i: (0, 0)              # constant index_map -> stays resident

    out = pl.pallas_call(
        _bottleneck_kernel,
        out_shape=jax.ShapeDtypeStruct((N, H, W, Cout), jnp.float32),
        grid_spec=pltpu.PrefetchScalarGridSpec(
            num_scalar_prefetch=0,
            grid=(N, H // TH),
            in_specs=[
                pl.BlockSpec(memory_space=pl.ANY),                         # x in HBM (halo rows)
                pl.BlockSpec((1, TH, W, Cin), lambda n, i: (n, i, 0, 0)),  # x tile
                pl.BlockSpec((Cin, P), res),                               # w1
                pl.BlockSpec((3, 3 * P, P), lambda n, i: (0, 0, 0)),       # w2 (per-dy fat)
                pl.BlockSpec((P, Cout), res),                              # w3
                pl.BlockSpec((1, P), res), pl.BlockSpec((1, P), res),      # s1, b1
                pl.BlockSpec((1, P), res), pl.BlockSpec((1, P), res),      # s2, b2
                pl.BlockSpec((1, Cout), res), pl.BlockSpec((1, Cout), res),  # s3, b3
            ],
            out_specs=pl.BlockSpec((1, TH, W, Cout), lambda n, i: (n, i, 0, 0)),
            scratch_shapes=[
                pltpu.VMEM((2, W, Cin), jnp.float32),       # halo x rows
                pltpu.VMEM((TH + 2, W, P), jnp.float32),    # conv2 input (row halo)
                pltpu.SemaphoreType.DMA((2,)),
            ],
        ),
        compiler_params=pltpu.CompilerParams(
            dimension_semantics=("parallel", "parallel"),   # v7x: shard across 2 TCs
            vmem_limit_bytes=32 * 1024 * 1024,
        ),
    )(x, x, w1, w2, w3, p["s1"], p["b1"], p["s2"], p["b2"], p["s3"], p["b3"])
    return jnp.transpose(out, (0, 3, 1, 2))                         # -> NCHW


def make_params(key, in_planes, planes, eps=1e-5):
    """Deterministic synthetic params. Conv weights stored matmul/HWIO style."""
    exp = 4
    ks = jax.random.split(key, 15)

    def bn_fold(kg, kb, km, kv, c):
        gamma = jax.random.uniform(kg, (c,), minval=0.5, maxval=1.5)
        beta = jax.random.normal(kb, (c,)) * 0.1
        mean = jax.random.normal(km, (c,)) * 0.1
        var = jax.random.uniform(kv, (c,), minval=0.5, maxval=1.5)
        scale = gamma / jnp.sqrt(var + eps)
        bias = beta - mean * scale
        return (scale.reshape(1, c).astype(jnp.float32),
                bias.reshape(1, c).astype(jnp.float32))

    w1 = (jax.random.normal(ks[0], (in_planes, planes)) * 0.1).astype(jnp.float32)
    w2 = (jax.random.normal(ks[1], (3, 3, planes, planes)) * 0.1).astype(jnp.float32)
    w3 = (jax.random.normal(ks[2], (planes, planes * exp)) * 0.1).astype(jnp.float32)
    s1, b1 = bn_fold(ks[3], ks[4], ks[5], ks[6], planes)
    s2, b2 = bn_fold(ks[7], ks[8], ks[9], ks[10], planes)
    s3, b3 = bn_fold(ks[11], ks[12], ks[13], ks[14], planes * exp)
    return dict(w1=w1, w2=w2, w3=w3, s1=s1, b1=b1, s2=s2, b2=b2, s3=s3, b3=b3)


def reference(x_nchw, p, matmul_dtype=None):
    """Pure-JAX reference (lax.conv), NHWC math, NCHW I/O.
    matmul_dtype=None  -> f32 HIGHEST-precision convs (the PyTorch-module spec).
    matmul_dtype=bf16  -> conv inputs/weights rounded to bf16 with f32 accumulation,
                          matching the kernel's MXU precision policy."""
    x = jnp.transpose(x_nchw, (0, 2, 3, 1)).astype(jnp.float32)
    dn = ("NHWC", "HWIO", "NHWC")
    cin, planes = p["w1"].shape
    cout = p["w3"].shape[1]

    def conv(h, w, padding):
        if matmul_dtype is not None:
            return jax.lax.conv_general_dilated(
                h.astype(matmul_dtype), w.astype(matmul_dtype), (1, 1), padding,
                dimension_numbers=dn, preferred_element_type=jnp.float32)
        return jax.lax.conv_general_dilated(
            h, w, (1, 1), padding, dimension_numbers=dn,
            precision=jax.lax.Precision.HIGHEST)

    h = conv(x, p["w1"].reshape(1, 1, cin, planes), "VALID")
    h = jnp.maximum(h * p["s1"][0] + p["b1"][0], 0.0)
    h = conv(h, p["w2"], "SAME")
    h = jnp.maximum(h * p["s2"][0] + p["b2"][0], 0.0)
    h = conv(h, p["w3"].reshape(1, 1, planes, cout), "VALID")
    h = h * p["s3"][0] + p["b3"][0]
    out = jnp.maximum(h + x, 0.0)
    return jnp.transpose(out, (0, 3, 1, 2))


if __name__ == "__main__":
    key = jax.random.PRNGKey(0)
    kx, kp = jax.random.split(key)

    planes = 4
    in_planes = planes * 4          # downsample=None => identity add must match
    N, H, W = 2, 16, 16

    x = jax.random.normal(kx, (N, in_planes, H, W), dtype=jnp.float32)
    params = make_params(kp, in_planes, planes)

    ref_f32 = reference(x, params)                               # module spec (f32)
    ref_bf16 = reference(x, params, matmul_dtype=jnp.bfloat16)   # precision-matched

    # tile_h=4 exercises first/interior/last row tiles (halo DMA path);
    # tile_h=16 exercises the single-tile (no-halo) path.
    for th in (4, 16):
        out = jax.block_until_ready(bottleneck_forward(x, params, tile_h=th))
        assert out.shape == (N, in_planes, H, W)
        err_m = float(jnp.max(jnp.abs(out - ref_bf16)))
        assert jnp.allclose(out, ref_bf16, atol=2e-3, rtol=2e-3), (
            f"tile_h={th}: mismatch vs precision-matched reference, max_err={err_m}")
        err_f = float(jnp.max(jnp.abs(out - ref_f32)))
        assert jnp.allclose(out, ref_f32, atol=5e-2, rtol=5e-2), (
            f"tile_h={th}: mismatch vs f32 reference, max_err={err_f}")

    print("KERNEL_OK")
</pallas_src>

<mosaic_0001>
module attributes {stable_mosaic.version = 11 : i64} {
  func.func @_bottleneck_kernel(%arg0: i32, %arg1: i32, %arg2: memref<2x16x16x16xf32, #tpu.memory_space<any>>, %arg3: memref<1x4x16x16xf32, #tpu.memory_space<vmem>>, %arg4: memref<16x4xbf16, #tpu.memory_space<vmem>>, %arg5: memref<3x12x4xbf16, #tpu.memory_space<vmem>>, %arg6: memref<4x16xbf16, #tpu.memory_space<vmem>>, %arg7: memref<1x4xf32, #tpu.memory_space<vmem>>, %arg8: memref<1x4xf32, #tpu.memory_space<vmem>>, %arg9: memref<1x4xf32, #tpu.memory_space<vmem>>, %arg10: memref<1x4xf32, #tpu.memory_space<vmem>>, %arg11: memref<1x16xf32, #tpu.memory_space<vmem>>, %arg12: memref<1x16xf32, #tpu.memory_space<vmem>>, %arg13: memref<1x4x16x16xf32, #tpu.memory_space<vmem>>, %arg14: memref<2x16x16xf32, #tpu.memory_space<vmem>>, %arg15: memref<6x16x4xf32, #tpu.memory_space<vmem>>, %arg16: memref<2x!tpu.dma_semaphore, #tpu.memory_space<semaphore_mem>>) attributes {dimension_semantics = [#tpu.dimension_semantics<parallel>, #tpu.dimension_semantics<parallel>], iteration_bounds = array<i64: 2, 4>, scalar_prefetch = 0 : i64, scratch_operands = 3 : i64, tpu.core_type = #tpu.core_type<tc>, window_params = [{}, {transform_indices = @transform_1, window_bounds = array<i64: 1, 4, 16, 16>}, {pipeline_mode = #tpu.pipeline_mode<synchronous>, transform_indices = @transform_2, window_bounds = array<i64: 16, 4>}, {pipeline_mode = #tpu.pipeline_mode<synchronous>, transform_indices = @transform_3, window_bounds = array<i64: 3, 12, 4>}, {pipeline_mode = #tpu.pipeline_mode<synchronous>, transform_indices = @transform_4, window_bounds = array<i64: 4, 16>}, {pipeline_mode = #tpu.pipeline_mode<synchronous>, transform_indices = @transform_5, window_bounds = array<i64: 1, 4>}, {pipeline_mode = #tpu.pipeline_mode<synchronous>, transform_indices = @transform_6, window_bounds = array<i64: 1, 4>}, {pipeline_mode = #tpu.pipeline_mode<synchronous>, transform_indices = @transform_7, window_bounds = array<i64: 1, 4>}, {pipeline_mode = #tpu.pipeline_mode<synchronous>, transform_indices = @transform_8, window_bounds = array<i64: 1, 4>}, {pipeline_mode = #tpu.pipeline_mode<synchronous>, transform_indices = @transform_9, window_bounds = array<i64: 1, 16>}, {pipeline_mode = #tpu.pipeline_mode<synchronous>, transform_indices = @transform_10, window_bounds = array<i64: 1, 16>}, {transform_indices = @transform_11, window_bounds = array<i64: 1, 4, 16, 16>}]} {
    %c4_i32 = arith.constant 4 : i32
    %0 = arith.muli %arg1, %c4_i32 : i32
    %c0_i32 = arith.constant 0 : i32
    %1 = arith.cmpi sgt, %arg1, %c0_i32 : i32
    %2 = arith.extui %1 : i1 to i32
    %c0_i32_0 = arith.constant 0 : i32
    %3 = arith.cmpi ne, %2, %c0_i32_0 : i32
    scf.if %3 {
      %c1_i32 = arith.constant 1 : i32
      %92 = arith.subi %0, %c1_i32 : i32
      %c0_i32_60 = arith.constant 0 : i32
      %c0_i32_61 = arith.constant 0 : i32
      %c0_i32_62 = arith.constant 0 : i32
      %c0_i32_63 = arith.constant 0 : i32
      %93 = tpu.memref_slice %arg2[%arg0, %92, %c0_i32_62, %c0_i32_63] : memref<2x16x16x16xf32, #tpu.memory_space<any>> -> memref<1x1x16x16xf32, #tpu.memory_space<any>>
      %94 = tpu.memref_squeeze %93 : memref<1x1x16x16xf32, #tpu.memory_space<any>> -> memref<16x16xf32, #tpu.memory_space<any>>
      %c0_i32_64 = arith.constant 0 : i32
      %c0_i32_65 = arith.constant 0 : i32
      %95 = tpu.memref_slice %arg14[%c0_i32_60, %c0_i32_64, %c0_i32_65] : memref<2x16x16xf32, #tpu.memory_space<vmem>> -> memref<1x16x16xf32, #tpu.memory_space<vmem>>
      %96 = tpu.memref_squeeze %95 : memref<1x16x16xf32, #tpu.memory_space<vmem>> -> memref<16x16xf32, #tpu.memory_space<vmem>>
      %97 = tpu.memref_slice %arg16[%c0_i32_61] : memref<2x!tpu.dma_semaphore, #tpu.memory_space<semaphore_mem>> -> memref<1x!tpu.dma_semaphore, #tpu.memory_space<semaphore_mem>>
      %98 = tpu.memref_squeeze %97 : memref<1x!tpu.dma_semaphore, #tpu.memory_space<semaphore_mem>> -> memref<!tpu.dma_semaphore, #tpu.memory_space<semaphore_mem>>
      tpu.enqueue_dma source(%94 : memref<16x16xf32, #tpu.memory_space<any>>) target(%96 : memref<16x16xf32, #tpu.memory_space<vmem>>) target_semaphore(%98 : memref<!tpu.dma_semaphore, #tpu.memory_space<semaphore_mem>>)
    } else {
    }
    %c3_i32 = arith.constant 3 : i32
    %4 = arith.cmpi slt, %arg1, %c3_i32 : i32
    %5 = arith.extui %4 : i1 to i32
    %c0_i32_1 = arith.constant 0 : i32
    %6 = arith.cmpi ne, %5, %c0_i32_1 : i32
    scf.if %6 {
      %c4_i32_60 = arith.constant 4 : i32
      %92 = arith.addi %0, %c4_i32_60 : i32
      %c1_i32 = arith.constant 1 : i32
      %c1_i32_61 = arith.constant 1 : i32
      %c0_i32_62 = arith.constant 0 : i32
      %c0_i32_63 = arith.constant 0 : i32
      %93 = tpu.memref_slice %arg2[%arg0, %92, %c0_i32_62, %c0_i32_63] : memref<2x16x16x16xf32, #tpu.memory_space<any>> -> memref<1x1x16x16xf32, #tpu.memory_space<any>>
      %94 = tpu.memref_squeeze %93 : memref<1x1x16x16xf32, #tpu.memory_space<any>> -> memref<16x16xf32, #tpu.memory_space<any>>
      %c0_i32_64 = arith.constant 0 : i32
      %c0_i32_65 = arith.constant 0 : i32
      %95 = tpu.memref_slice %arg14[%c1_i32, %c0_i32_64, %c0_i32_65] : memref<2x16x16xf32, #tpu.memory_space<vmem>> -> memref<1x16x16xf32, #tpu.memory_space<vmem>>
      %96 = tpu.memref_squeeze %95 : memref<1x16x16xf32, #tpu.memory_space<vmem>> -> memref<16x16xf32, #tpu.memory_space<vmem>>
      %97 = tpu.memref_slice %arg16[%c1_i32_61] : memref<2x!tpu.dma_semaphore, #tpu.memory_space<semaphore_mem>> -> memref<1x!tpu.dma_semaphore, #tpu.memory_space<semaphore_mem>>
      %98 = tpu.memref_squeeze %97 : memref<1x!tpu.dma_semaphore, #tpu.memory_space<semaphore_mem>> -> memref<!tpu.dma_semaphore, #tpu.memory_space<semaphore_mem>>
      tpu.enqueue_dma source(%94 : memref<16x16xf32, #tpu.memory_space<any>>) target(%96 : memref<16x16xf32, #tpu.memory_space<vmem>>) target_semaphore(%98 : memref<!tpu.dma_semaphore, #tpu.memory_space<semaphore_mem>>)
    } else {
    }
    %c0 = arith.constant 0 : index
    %c0_2 = arith.constant 0 : index
    %7 = vector.load %arg7[%c0, %c0_2] : memref<1x4xf32, #tpu.memory_space<vmem>>, vector<1x4xf32>
    %c0_3 = arith.constant 0 : index
    %c0_4 = arith.constant 0 : index
    %8 = vector.load %arg8[%c0_3, %c0_4] : memref<1x4xf32, #tpu.memory_space<vmem>>, vector<1x4xf32>
    %c0_5 = arith.constant 0 : index
    %c0_6 = arith.constant 0 : index
    %9 = vector.load %arg9[%c0_5, %c0_6] : memref<1x4xf32, #tpu.memory_space<vmem>>, vector<1x4xf32>
    %c0_7 = arith.constant 0 : index
    %c0_8 = arith.constant 0 : index
    %10 = vector.load %arg10[%c0_7, %c0_8] : memref<1x4xf32, #tpu.memory_space<vmem>>, vector<1x4xf32>
    %c0_9 = arith.constant 0 : index
    %c0_10 = arith.constant 0 : index
    %11 = vector.load %arg11[%c0_9, %c0_10] : memref<1x16xf32, #tpu.memory_space<vmem>>, vector<1x16xf32>
    %c0_11 = arith.constant 0 : index
    %c0_12 = arith.constant 0 : index
    %12 = vector.load %arg12[%c0_11, %c0_12] : memref<1x16xf32, #tpu.memory_space<vmem>>, vector<1x16xf32>
    %c0_13 = arith.constant 0 : index
    %c0_14 = arith.constant 0 : index
    %13 = vector.load %arg4[%c0_13, %c0_14] : memref<16x4xbf16, #tpu.memory_space<vmem>>, vector<16x4xbf16>
    %c0_15 = arith.constant 0 : index
    %c0_16 = arith.constant 0 : index
    %14 = vector.load %arg6[%c0_15, %c0_16] : memref<4x16xbf16, #tpu.memory_space<vmem>>, vector<4x16xbf16>
    %c0_17 = arith.constant 0 : index
    %c0_18 = arith.constant 0 : index
    %c0_19 = arith.constant 0 : index
    %c0_20 = arith.constant 0 : index
    %15 = vector.load %arg3[%c0_17, %c0_18, %c0_19, %c0_20] : memref<1x4x16x16xf32, #tpu.memory_space<vmem>>, vector<1x4x16x16xf32>
    %16 = vector.shape_cast %15 : vector<1x4x16x16xf32> to vector<64x16xf32>
    %17 = arith.truncf %16 : vector<64x16xf32> to vector<64x16xbf16>
    %cst = arith.constant dense<0.000000e+00> : vector<64x4xf32>
    %18 = tpu.matmul %17, %13, %cst {dimension_numbers = #tpu.dot_dimension_numbers<[1], [0], [0], [1], [0, 0, 1, 1], [], []>} : vector<64x16xbf16>, vector<16x4xbf16>, vector<64x4xf32> -> vector<64x4xf32>
    %19 = vector.broadcast %7 : vector<1x4xf32> to vector<64x4xf32>
    %20 = arith.mulf %18, %19 : vector<64x4xf32>
    %21 = vector.broadcast %8 : vector<1x4xf32> to vector<64x4xf32>
    %22 = arith.addf %20, %21 : vector<64x4xf32>
    %cst_21 = arith.constant 0.000000e+00 : f32
    %23 = vector.broadcast %cst_21 : f32 to vector<64x4xf32>
    %24 = arith.maximumf %22, %23 : vector<64x4xf32>
    %25 = vector.shape_cast %24 : vector<64x4xf32> to vector<4x16x4xf32>
    %c1 = arith.constant 1 : index
    %c0_22 = arith.constant 0 : index
    %c0_23 = arith.constant 0 : index
    %26 = vector.load %arg15[%c1, %c0_22, %c0_23] : memref<6x16x4xf32, #tpu.memory_space<vmem>>, vector<4x16x4xf32>
    tpu.vector_store %arg15[%c1, %c0_22, %c0_23], %25 {strides = array<i32>} : memref<6x16x4xf32, #tpu.memory_space<vmem>>, vector<4x16x4xf32>,
    %c0_i32_24 = arith.constant 0 : i32
    %27 = arith.cmpi eq, %arg1, %c0_i32_24 : i32
    %28 = arith.extui %27 : i1 to i32
    %c0_i32_25 = arith.constant 0 : i32
    %29 = arith.cmpi ne, %28, %c0_i32_25 : i32
    scf.if %29 {
      %cst_60 = arith.constant 0.000000e+00 : f32
      %92 = vector.broadcast %cst_60 : f32 to vector<16x4xf32>
      %c0_61 = arith.constant 0 : index
      %c0_62 = arith.constant 0 : index
      %c0_63 = arith.constant 0 : index
      %93 = vector.load %arg15[%c0_61, %c0_62, %c0_63] : memref<6x16x4xf32, #tpu.memory_space<vmem>>, vector<1x16x4xf32>
      %94 = vector.shape_cast %93 : vector<1x16x4xf32> to vector<16x4xf32>
      %95 = vector.shape_cast %92 : vector<16x4xf32> to vector<1x16x4xf32>
      tpu.vector_store %arg15[%c0_61, %c0_62, %c0_63], %95 {strides = array<i32>} : memref<6x16x4xf32, #tpu.memory_space<vmem>>, vector<1x16x4xf32>,
    } else {
    }
    %c0_i32_26 = arith.constant 0 : i32
    %30 = arith.cmpi sgt, %arg1, %c0_i32_26 : i32
    %31 = arith.extui %30 : i1 to i32
    %c0_i32_27 = arith.constant 0 : i32
    %32 = arith.cmpi ne, %31, %c0_i32_27 : i32
    scf.if %32 {
      %c1_i32 = arith.constant 1 : i32
      %92 = arith.subi %0, %c1_i32 : i32
      %c0_i32_60 = arith.constant 0 : i32
      %c0_i32_61 = arith.constant 0 : i32
      %c0_i32_62 = arith.constant 0 : i32
      %c0_i32_63 = arith.constant 0 : i32
      %93 = tpu.memref_slice %arg2[%arg0, %92, %c0_i32_62, %c0_i32_63] : memref<2x16x16x16xf32, #tpu.memory_space<any>> -> memref<1x1x16x16xf32, #tpu.memory_space<any>>
      %94 = tpu.memref_squeeze %93 : memref<1x1x16x16xf32, #tpu.memory_space<any>> -> memref<16x16xf32, #tpu.memory_space<any>>
      %c0_i32_64 = arith.constant 0 : i32
      %c0_i32_65 = arith.constant 0 : i32
      %95 = tpu.memref_slice %arg14[%c0_i32_60, %c0_i32_64, %c0_i32_65] : memref<2x16x16xf32, #tpu.memory_space<vmem>> -> memref<1x16x16xf32, #tpu.memory_space<vmem>>
      %96 = tpu.memref_squeeze %95 : memref<1x16x16xf32, #tpu.memory_space<vmem>> -> memref<16x16xf32, #tpu.memory_space<vmem>>
      %97 = tpu.memref_slice %arg16[%c0_i32_61] : memref<2x!tpu.dma_semaphore, #tpu.memory_space<semaphore_mem>> -> memref<1x!tpu.dma_semaphore, #tpu.memory_space<semaphore_mem>>
      %98 = tpu.memref_squeeze %97 : memref<1x!tpu.dma_semaphore, #tpu.memory_space<semaphore_mem>> -> memref<!tpu.dma_semaphore, #tpu.memory_space<semaphore_mem>>
      tpu.wait_dma2 semaphore(%98 : memref<!tpu.dma_semaphore, #tpu.memory_space<semaphore_mem>>) src(%94 : memref<16x16xf32, #tpu.memory_space<any>>) dst(%96 : memref<16x16xf32, #tpu.memory_space<vmem>>)
      %c0_66 = arith.constant 0 : index
      %c0_67 = arith.constant 0 : index
      %c0_68 = arith.constant 0 : index
      %99 = vector.load %arg14[%c0_66, %c0_67, %c0_68] : memref<2x16x16xf32, #tpu.memory_space<vmem>>, vector<1x16x16xf32>
      %100 = vector.shape_cast %99 : vector<1x16x16xf32> to vector<16x16xf32>
      %101 = arith.truncf %100 : vector<16x16xf32> to vector<16x16xbf16>
      %cst_69 = arith.constant dense<0.000000e+00> : vector<16x4xf32>
      %102 = tpu.matmul %101, %13, %cst_69 {dimension_numbers = #tpu.dot_dimension_numbers<[1], [0], [0], [1], [0, 0, 1, 1], [], []>} : vector<16x16xbf16>, vector<16x4xbf16>, vector<16x4xf32> -> vector<16x4xf32>
      %103 = vector.broadcast %7 : vector<1x4xf32> to vector<16x4xf32>
      %104 = arith.mulf %102, %103 : vector<16x4xf32>
      %105 = vector.broadcast %8 : vector<1x4xf32> to vector<16x4xf32>
      %106 = arith.addf %104, %105 : vector<16x4xf32>
      %cst_70 = arith.constant 0.000000e+00 : f32
      %107 = vector.broadcast %cst_70 : f32 to vector<16x4xf32>
      %108 = arith.maximumf %106, %107 : vector<16x4xf32>
      %c0_71 = arith.constant 0 : index
      %c0_72 = arith.constant 0 : index
      %c0_73 = arith.constant 0 : index
      %109 = vector.load %arg15[%c0_71, %c0_72, %c0_73] : memref<6x16x4xf32, #tpu.memory_space<vmem>>, vector<1x16x4xf32>
      %110 = vector.shape_cast %109 : vector<1x16x4xf32> to vector<16x4xf32>
      %111 = vector.shape_cast %108 : vector<16x4xf32> to vector<1x16x4xf32>
      tpu.vector_store %arg15[%c0_71, %c0_72, %c0_73], %111 {strides = array<i32>} : memref<6x16x4xf32, #tpu.memory_space<vmem>>, vector<1x16x4xf32>,
    } else {
    }
    %c3_i32_28 = arith.constant 3 : i32
    %33 = arith.cmpi eq, %arg1, %c3_i32_28 : i32
    %34 = arith.extui %33 : i1 to i32
    %c0_i32_29 = arith.constant 0 : i32
    %35 = arith.cmpi ne, %34, %c0_i32_29 : i32
    scf.if %35 {
      %cst_60 = arith.constant 0.000000e+00 : f32
      %92 = vector.broadcast %cst_60 : f32 to vector<16x4xf32>
      %c5 = arith.constant 5 : index
      %c0_61 = arith.constant 0 : index
      %c0_62 = arith.constant 0 : index
      %93 = vector.load %arg15[%c5, %c0_61, %c0_62] : memref<6x16x4xf32, #tpu.memory_space<vmem>>, vector<1x16x4xf32>
      %94 = vector.shape_cast %93 : vector<1x16x4xf32> to vector<16x4xf32>
      %95 = vector.shape_cast %92 : vector<16x4xf32> to vector<1x16x4xf32>
      tpu.vector_store %arg15[%c5, %c0_61, %c0_62], %95 {strides = array<i32>} : memref<6x16x4xf32, #tpu.memory_space<vmem>>, vector<1x16x4xf32>,
    } else {
    }
    %c3_i32_30 = arith.constant 3 : i32
    %36 = arith.cmpi slt, %arg1, %c3_i32_30 : i32
    %37 = arith.extui %36 : i1 to i32
    %c0_i32_31 = arith.constant 0 : i32
    %38 = arith.cmpi ne, %37, %c0_i32_31 : i32
    scf.if %38 {
      %c4_i32_60 = arith.constant 4 : i32
      %92 = arith.addi %0, %c4_i32_60 : i32
      %c1_i32 = arith.constant 1 : i32
      %c1_i32_61 = arith.constant 1 : i32
      %c0_i32_62 = arith.constant 0 : i32
      %c0_i32_63 = arith.constant 0 : i32
      %93 = tpu.memref_slice %arg2[%arg0, %92, %c0_i32_62, %c0_i32_63] : memref<2x16x16x16xf32, #tpu.memory_space<any>> -> memref<1x1x16x16xf32, #tpu.memory_space<any>>
      %94 = tpu.memref_squeeze %93 : memref<1x1x16x16xf32, #tpu.memory_space<any>> -> memref<16x16xf32, #tpu.memory_space<any>>
      %c0_i32_64 = arith.constant 0 : i32
      %c0_i32_65 = arith.constant 0 : i32
      %95 = tpu.memref_slice %arg14[%c1_i32, %c0_i32_64, %c0_i32_65] : memref<2x16x16xf32, #tpu.memory_space<vmem>> -> memref<1x16x16xf32, #tpu.memory_space<vmem>>
      %96 = tpu.memref_squeeze %95 : memref<1x16x16xf32, #tpu.memory_space<vmem>> -> memref<16x16xf32, #tpu.memory_space<vmem>>
      %97 = tpu.memref_slice %arg16[%c1_i32_61] : memref<2x!tpu.dma_semaphore, #tpu.memory_space<semaphore_mem>> -> memref<1x!tpu.dma_semaphore, #tpu.memory_space<semaphore_mem>>
      %98 = tpu.memref_squeeze %97 : memref<1x!tpu.dma_semaphore, #tpu.memory_space<semaphore_mem>> -> memref<!tpu.dma_semaphore, #tpu.memory_space<semaphore_mem>>
      tpu.wait_dma2 semaphore(%98 : memref<!tpu.dma_semaphore, #tpu.memory_space<semaphore_mem>>) src(%94 : memref<16x16xf32, #tpu.memory_space<any>>) dst(%96 : memref<16x16xf32, #tpu.memory_space<vmem>>)
      %c1_66 = arith.constant 1 : index
      %c0_67 = arith.constant 0 : index
      %c0_68 = arith.constant 0 : index
      %99 = vector.load %arg14[%c1_66, %c0_67, %c0_68] : memref<2x16x16xf32, #tpu.memory_space<vmem>>, vector<1x16x16xf32>
      %100 = vector.shape_cast %99 : vector<1x16x16xf32> to vector<16x16xf32>
      %101 = arith.truncf %100 : vector<16x16xf32> to vector<16x16xbf16>
      %cst_69 = arith.constant dense<0.000000e+00> : vector<16x4xf32>
      %102 = tpu.matmul %101, %13, %cst_69 {dimension_numbers = #tpu.dot_dimension_numbers<[1], [0], [0], [1], [0, 0, 1, 1], [], []>} : vector<16x16xbf16>, vector<16x4xbf16>, vector<16x4xf32> -> vector<16x4xf32>
      %103 = vector.broadcast %7 : vector<1x4xf32> to vector<16x4xf32>
      %104 = arith.mulf %102, %103 : vector<16x4xf32>
      %105 = vector.broadcast %8 : vector<1x4xf32> to vector<16x4xf32>
      %106 = arith.addf %104, %105 : vector<16x4xf32>
      %cst_70 = arith.constant 0.000000e+00 : f32
      %107 = vector.broadcast %cst_70 : f32 to vector<16x4xf32>
      %108 = arith.maximumf %106, %107 : vector<16x4xf32>
      %c5 = arith.constant 5 : index
      %c0_71 = arith.constant 0 : index
      %c0_72 = arith.constant 0 : index
      %109 = vector.load %arg15[%c5, %c0_71, %c0_72] : memref<6x16x4xf32, #tpu.memory_space<vmem>>, vector<1x16x4xf32>
      %110 = vector.shape_cast %109 : vector<1x16x4xf32> to vector<16x4xf32>
      %111 = vector.shape_cast %108 : vector<16x4xf32> to vector<1x16x4xf32>
      tpu.vector_store %arg15[%c5, %c0_71, %c0_72], %111 {strides = array<i32>} : memref<6x16x4xf32, #tpu.memory_space<vmem>>, vector<1x16x4xf32>,
    } else {
    }
    %cst_32 = arith.constant 0.000000e+00 : f32
    %39 = vector.broadcast %cst_32 : f32 to vector<4x1x4xf32>
    %c0_33 = arith.constant 0 : index
    %c0_34 = arith.constant 0 : index
    %c0_35 = arith.constant 0 : index
    %40 = vector.load %arg15[%c0_33, %c0_34, %c0_35] : memref<6x16x4xf32, #tpu.memory_space<vmem>>, vector<4x16x4xf32>
    %41 = vector.extract_strided_slice %40 {offsets = [0, 0, 0], sizes = [4, 15, 4], strides = [1, 1, 1]} : vector<4x16x4xf32> to vector<4x15x4xf32>
    %42 = tpu.concatenate %39, %41 in 1 : vector<4x1x4xf32>, vector<4x15x4xf32> -> vector<4x16x4xf32>
    %43 = vector.extract_strided_slice %40 {offsets = [0, 1, 0], sizes = [4, 15, 4], strides = [1, 1, 1]} : vector<4x16x4xf32> to vector<4x15x4xf32>
    %44 = tpu.concatenate %43, %39 in 1 : vector<4x15x4xf32>, vector<4x1x4xf32> -> vector<4x16x4xf32>
    %45 = tpu.concatenate %42, %40, %44 in 2 : vector<4x16x4xf32>, vector<4x16x4xf32>, vector<4x16x4xf32> -> vector<4x16x12xf32>
    %46 = vector.shape_cast %45 : vector<4x16x12xf32> to vector<64x12xf32>
    %47 = arith.truncf %46 : vector<64x12xf32> to vector<64x12xbf16>
    %c0_36 = arith.constant 0 : index
    %c0_37 = arith.constant 0 : index
    %c0_38 = arith.constant 0 : index
    %48 = vector.load %arg5[%c0_36, %c0_37, %c0_38] : memref<3x12x4xbf16, #tpu.memory_space<vmem>>, vector<1x12x4xbf16>
    %49 = vector.shape_cast %48 : vector<1x12x4xbf16> to vector<12x4xbf16>
    %cst_39 = arith.constant dense<0.000000e+00> : vector<64x4xf32>
    %50 = tpu.matmul %47, %49, %cst_39 {dimension_numbers = #tpu.dot_dimension_numbers<[1], [0], [0], [1], [0, 0, 1, 1], [], []>} : vector<64x12xbf16>, vector<12x4xbf16>, vector<64x4xf32> -> vector<64x4xf32>
    %c1_40 = arith.constant 1 : index
    %c0_41 = arith.constant 0 : index
    %c0_42 = arith.constant 0 : index
    %51 = vector.load %arg15[%c1_40, %c0_41, %c0_42] : memref<6x16x4xf32, #tpu.memory_space<vmem>>, vector<4x16x4xf32>
    %52 = vector.extract_strided_slice %51 {offsets = [0, 0, 0], sizes = [4, 15, 4], strides = [1, 1, 1]} : vector<4x16x4xf32> to vector<4x15x4xf32>
    %53 = tpu.concatenate %39, %52 in 1 : vector<4x1x4xf32>, vector<4x15x4xf32> -> vector<4x16x4xf32>
    %54 = vector.extract_strided_slice %51 {offsets = [0, 1, 0], sizes = [4, 15, 4], strides = [1, 1, 1]} : vector<4x16x4xf32> to vector<4x15x4xf32>
    %55 = tpu.concatenate %54, %39 in 1 : vector<4x15x4xf32>, vector<4x1x4xf32> -> vector<4x16x4xf32>
    %56 = tpu.concatenate %53, %51, %55 in 2 : vector<4x16x4xf32>, vector<4x16x4xf32>, vector<4x16x4xf32> -> vector<4x16x12xf32>
    %57 = vector.shape_cast %56 : vector<4x16x12xf32> to vector<64x12xf32>
    %58 = arith.truncf %57 : vector<64x12xf32> to vector<64x12xbf16>
    %c1_43 = arith.constant 1 : index
    %c0_44 = arith.constant 0 : index
    %c0_45 = arith.constant 0 : index
    %59 = vector.load %arg5[%c1_43, %c0_44, %c0_45] : memref<3x12x4xbf16, #tpu.memory_space<vmem>>, vector<1x12x4xbf16>
    %60 = vector.shape_cast %59 : vector<1x12x4xbf16> to vector<12x4xbf16>
    %cst_46 = arith.constant dense<0.000000e+00> : vector<64x4xf32>
    %61 = tpu.matmul %58, %60, %cst_46 {dimension_numbers = #tpu.dot_dimension_numbers<[1], [0], [0], [1], [0, 0, 1, 1], [], []>} : vector<64x12xbf16>, vector<12x4xbf16>, vector<64x4xf32> -> vector<64x4xf32>
    %62 = arith.addf %50, %61 : vector<64x4xf32>
    %c2 = arith.constant 2 : index
    %c0_47 = arith.constant 0 : index
    %c0_48 = arith.constant 0 : index
    %63 = vector.load %arg15[%c2, %c0_47, %c0_48] : memref<6x16x4xf32, #tpu.memory_space<vmem>>, vector<4x16x4xf32>
    %64 = vector.extract_strided_slice %63 {offsets = [0, 0, 0], sizes = [4, 15, 4], strides = [1, 1, 1]} : vector<4x16x4xf32> to vector<4x15x4xf32>
    %65 = tpu.concatenate %39, %64 in 1 : vector<4x1x4xf32>, vector<4x15x4xf32> -> vector<4x16x4xf32>
    %66 = vector.extract_strided_slice %63 {offsets = [0, 1, 0], sizes = [4, 15, 4], strides = [1, 1, 1]} : vector<4x16x4xf32> to vector<4x15x4xf32>
    %67 = tpu.concatenate %66, %39 in 1 : vector<4x15x4xf32>, vector<4x1x4xf32> -> vector<4x16x4xf32>
    %68 = tpu.concatenate %65, %63, %67 in 2 : vector<4x16x4xf32>, vector<4x16x4xf32>, vector<4x16x4xf32> -> vector<4x16x12xf32>
    %69 = vector.shape_cast %68 : vector<4x16x12xf32> to vector<64x12xf32>
    %70 = arith.truncf %69 : vector<64x12xf32> to vector<64x12xbf16>
    %c2_49 = arith.constant 2 : index
    %c0_50 = arith.constant 0 : index
    %c0_51 = arith.constant 0 : index
    %71 = vector.load %arg5[%c2_49, %c0_50, %c0_51] : memref<3x12x4xbf16, #tpu.memory_space<vmem>>, vector<1x12x4xbf16>
    %72 = vector.shape_cast %71 : vector<1x12x4xbf16> to vector<12x4xbf16>
    %cst_52 = arith.constant dense<0.000000e+00> : vector<64x4xf32>
    %73 = tpu.matmul %70, %72, %cst_52 {dimension_numbers = #tpu.dot_dimension_numbers<[1], [0], [0], [1], [0, 0, 1, 1], [], []>} : vector<64x12xbf16>, vector<12x4xbf16>, vector<64x4xf32> -> vector<64x4xf32>
    %74 = arith.addf %62, %73 : vector<64x4xf32>
    %75 = vector.broadcast %9 : vector<1x4xf32> to vector<64x4xf32>
    %76 = arith.mulf %74, %75 : vector<64x4xf32>
    %77 = vector.broadcast %10 : vector<1x4xf32> to vector<64x4xf32>
    %78 = arith.addf %76, %77 : vector<64x4xf32>
    %cst_53 = arith.constant 0.000000e+00 : f32
    %79 = vector.broadcast %cst_53 : f32 to vector<64x4xf32>
    %80 = arith.maximumf %78, %79 : vector<64x4xf32>
    %81 = arith.truncf %80 : vector<64x4xf32> to vector<64x4xbf16>
    %cst_54 = arith.constant dense<0.000000e+00> : vector<64x16xf32>
    %82 = tpu.matmul %81, %14, %cst_54 {dimension_numbers = #tpu.dot_dimension_numbers<[1], [0], [0], [1], [0, 0, 1, 1], [], []>} : vector<64x4xbf16>, vector<4x16xbf16>, vector<64x16xf32> -> vector<64x16xf32>
    %83 = vector.broadcast %11 : vector<1x16xf32> to vector<64x16xf32>
    %84 = arith.mulf %82, %83 : vector<64x16xf32>
    %85 = vector.broadcast %12 : vector<1x16xf32> to vector<64x16xf32>
    %86 = arith.addf %84, %85 : vector<64x16xf32>
    %87 = arith.addf %86, %16 : vector<64x16xf32>
    %cst_55 = arith.constant 0.000000e+00 : f32
    %88 = vector.broadcast %cst_55 : f32 to vector<64x16xf32>
    %89 = arith.maximumf %87, %88 : vector<64x16xf32>
    %90 = vector.shape_cast %89 : vector<64x16xf32> to vector<1x4x16x16xf32>
    %c0_56 = arith.constant 0 : index
    %c0_57 = arith.constant 0 : index
    %c0_58 = arith.constant 0 : index
    %c0_59 = arith.constant 0 : index
    %91 = vector.load %arg13[%c0_56, %c0_57, %c0_58, %c0_59] : memref<1x4x16x16xf32, #tpu.memory_space<vmem>>, vector<1x4x16x16xf32>
    tpu.vector_store %arg13[%c0_56, %c0_57, %c0_58, %c0_59], %90 {strides = array<i32>} : memref<1x4x16x16xf32, #tpu.memory_space<vmem>>, vector<1x4x16x16xf32>,
    return
  }
  func.func @transform_1(%arg0: i32, %arg1: i32) -> (i32, i32, i32, i32) {
    %c0_i32 = arith.constant 0 : i32
    %c0_i32_0 = arith.constant 0 : i32
    %c0_i32_1 = arith.constant 0 : i32
    return %arg0, %arg1, %c0_i32, %c0_i32_0 : i32, i32, i32, i32
  }
  func.func @transform_2(%arg0: i32, %arg1: i32) -> (i32, i32) {
    %c0_i32 = arith.constant 0 : i32
    %c0_i32_0 = arith.constant 0 : i32
    %c0_i32_1 = arith.constant 0 : i32
    return %c0_i32, %c0_i32_0 : i32, i32
  }
  func.func @transform_3(%arg0: i32, %arg1: i32) -> (i32, i32, i32) {
    %c0_i32 = arith.constant 0 : i32
    %c0_i32_0 = arith.constant 0 : i32
    %c0_i32_1 = arith.constant 0 : i32
    %c0_i32_2 = arith.constant 0 : i32
    return %c0_i32, %c0_i32_0, %c0_i32_1 : i32, i32, i32
  }
  func.func @transform_4(%arg0: i32, %arg1: i32) -> (i32, i32) {
    %c0_i32 = arith.constant 0 : i32
    %c0_i32_0 = arith.constant 0 : i32
    %c0_i32_1 = arith.constant 0 : i32
    return %c0_i32, %c0_i32_0 : i32, i32
  }
  func.func @transform_5(%arg0: i32, %arg1: i32) -> (i32, i32) {
    %c0_i32 = arith.constant 0 : i32
    %c0_i32_0 = arith.constant 0 : i32
    %c0_i32_1 = arith.constant 0 : i32
    return %c0_i32, %c0_i32_0 : i32, i32
  }
  func.func @transform_6(%arg0: i32, %arg1: i32) -> (i32, i32) {
    %c0_i32 = arith.constant 0 : i32
    %c0_i32_0 = arith.constant 0 : i32
    %c0_i32_1 = arith.constant 0 : i32
    return %c0_i32, %c0_i32_0 : i32, i32
  }
  func.func @transform_7(%arg0: i32, %arg1: i32) -> (i32, i32) {
    %c0_i32 = arith.constant 0 : i32
    %c0_i32_0 = arith.constant 0 : i32
    %c0_i32_1 = arith.constant 0 : i32
    return %c0_i32, %c0_i32_0 : i32, i32
  }
  func.func @transform_8(%arg0: i32, %arg1: i32) -> (i32, i32) {
    %c0_i32 = arith.constant 0 : i32
    %c0_i32_0 = arith.constant 0 : i32
    %c0_i32_1 = arith.constant 0 : i32
    return %c0_i32, %c0_i32_0 : i32, i32
  }
  func.func @transform_9(%arg0: i32, %arg1: i32) -> (i32, i32) {
    %c0_i32 = arith.constant 0 : i32
    %c0_i32_0 = arith.constant 0 : i32
    %c0_i32_1 = arith.constant 0 : i32
    return %c0_i32, %c0_i32_0 : i32, i32
  }
  func.func @transform_10(%arg0: i32, %arg1: i32) -> (i32, i32) {
    %c0_i32 = arith.constant 0 : i32
    %c0_i32_0 = arith.constant 0 : i32
    %c0_i32_1 = arith.constant 0 : i32
    return %c0_i32, %c0_i32_0 : i32, i32
  }
  func.func @transform_11(%arg0: i32, %arg1: i32) -> (i32, i32, i32, i32) {
    %c0_i32 = arith.constant 0 : i32
    %c0_i32_0 = arith.constant 0 : i32
    %c0_i32_1 = arith.constant 0 : i32
    return %arg0, %arg1, %c0_i32, %c0_i32_0 : i32, i32, i32, i32
  }
}

</mosaic_0001>

<llo_original>
// kernel: tpu_custom_call.1
$region0: #{tpu_custom_call.1}
  #allocation0 [shape = 'u32[]', space=smem, size = 0x4, offset = 0x4, fixed_abs, tag = 'smem constant byte address 0x4 - core index']
  #allocation1 [shape = 'u32[144,128]{1,0:T(1,128)}', space=vmem, size = 0x12000, scoped, tag = 'internal scratch']
  #allocation2 [shape = 'f32[2,16,16]{2,1,0:T(8,128)}', space=vmem, size = 0x4000, scoped, tag = 'scratch operand']
  #allocation3 [shape = 'f32[6,16,4]{2,1,0:T(8,128)}', space=vmem, size = 0xc000, scoped, tag = 'scratch operand']
  #allocation4 [shape = 's32[2]{0}', space=sflag, size = 0x8, scoped, tag = 'scratch operand']
  #allocation9 [shape = 's32[]', space=sflag, size = 0x4, offset = 0, fixed_abs, tag = 'sflag constant byte address 0x0 - dummy sync flag']
  #allocation10 [shape = 's32[]', space=sflag, size = 0x4, offset = 0, fixed_abs, tag = 'sflag constant byte address 0x0 - dummy sync flag']
  #allocation11 [shape = 'u32[]', space=smem, size = 0x4, offset = 0x44, fixed_abs, tag = 'smem constant byte address 0x44 - assertion arg 0']
  #allocation12 [shape = 'u32[]', space=smem, size = 0x4, offset = 0x48, fixed_abs, tag = 'smem constant byte address 0x48 - assertion arg 1']
  #allocation13 [shape = 's32[]', space=sflag, size = 0x4, offset = 0, fixed_abs, tag = 'sflag constant byte address 0x0 - dummy sync flag']
  #allocation14 [shape = 's32[]', space=sflag, size = 0x4, offset = 0, fixed_abs, tag = 'sflag constant byte address 0x0 - dummy sync flag']
  %s0 = inlined_call_operand.hbm [shape: f32[2,16,16,16], index: 0, kind: input, shape index: {}]
  %s1 = inlined_call_operand.hbm [shape: f32[2,16,16,16], index: 1, kind: input, shape index: {}]
  %s2 = inlined_call_operand.vmem [shape: bf16[16,4], index: 2, kind: input, shape index: {}]
  %s3 = inlined_call_operand.vmem [shape: bf16[3,12,4], index: 3, kind: input, shape index: {}]
  %s4 = inlined_call_operand.vmem [shape: bf16[4,16], index: 4, kind: input, shape index: {}]
  %s5 = inlined_call_operand.vmem [shape: f32[1,4], index: 5, kind: input, shape index: {}]
  %s6 = inlined_call_operand.vmem [shape: f32[1,4], index: 6, kind: input, shape index: {}]
  %s7 = inlined_call_operand.vmem [shape: f32[1,4], index: 7, kind: input, shape index: {}]
  %s8 = inlined_call_operand.vmem [shape: f32[1,4], index: 8, kind: input, shape index: {}]
  %s9 = inlined_call_operand.vmem [shape: f32[1,16], index: 9, kind: input, shape index: {}]
  %s10 = inlined_call_operand.vmem [shape: f32[1,16], index: 10, kind: input, shape index: {}]
  %s11 = inlined_call_operand.hbm [shape: f32[2,16,16,16], index: 11, kind: output, shape index: {}]
  %s12 = sld [smem:[#allocation0]]
  $region109: #{tpu_custom_call.1} parent=0
    _
  %s14 = ssub.s32 1, %s12
  %s15 = scalar_select 0, %s14, %s12
  $region1: #{tpu_custom_call.1} parent=0
    #allocation5 [shape = 'u8[65536]{0}', space=vmem, size = 0x10000, scoped, tag = 'input window, operand 1']
    #allocation6 [shape = 's32[2]{0}', space=sflag, size = 0x8, scoped, tag = 'scoped memory for tpu_custom_call.1']
    #allocation7 [shape = 's32[2]{0}', space=sflag, size = 0x8, scoped, tag = 'scoped memory for tpu_custom_call.1']
    #allocation8 [shape = 'u8[65536]{0}', space=vmem, size = 0x10000, scoped, tag = 'output window, operand 0']
    %16 = vsyncpa [#allocation6], 0
    %s17 = scalar_lea.sflag [#allocation6], 1
    %18 = vsyncpa %s17, 0
    %19 = vsyncpa [#allocation7], 0
    %s20 = scalar_lea.sflag [#allocation7], 1
    %21 = vsyncpa %s20, 0
    loop: start=0, step=1, limit=10
    $region2: #{tpu_custom_call.1} parent=1 // loop_pre_header
      _
    $region3: #{tpu_custom_call.1} parent=1 // loop_header
      %s23 = sphi 0, %s27
      %p24 = scmp.ge.s32.totalorder %s23, 10
      %s30 = sphi 0, %s42
      %s31 = sphi 0, %s38
      %s32 = sphi 0, %s30
      %s33 = sphi 0, %s31
      %s34 = sphi 0, %s32
      %s35 = sphi 0, %s33
      %s47 = sphi 0, %s49
      %s50 = sphi 0, %s47
      %s51 = sphi 0, %s50
      %s67 = sphi 0, %s51
      %s71 = sphi 0, %s71
      %s73 = sphi 0, %s71
      %s74 = sphi 0, %s73
      %s88 = sphi 0, %s74
      %s92 = sphi 0, %s92
      %s94 = sphi 0, %s92
      %s95 = sphi 0, %s94
      %s109 = sphi 0, %s95
      %s113 = sphi 0, %s113
      %s115 = sphi 0, %s113
      %s116 = sphi 0, %s115
      %s130 = sphi 0, %s116
      %s134 = sphi 0, %s134
      %s136 = sphi 0, %s134
      %s137 = sphi 0, %s136
      %s151 = sphi 0, %s137
      %s155 = sphi 0, %s155
      %s157 = sphi 0, %s155
      %s158 = sphi 0, %s157
      %s172 = sphi 0, %s158
      %s176 = sphi 0, %s176
      %s178 = sphi 0, %s176
      %s179 = sphi 0, %s178
      %s193 = sphi 0, %s179
      %s197 = sphi 0, %s197
      %s199 = sphi 0, %s197
      %s200 = sphi 0, %s199
      %s214 = sphi 0, %s200
      %s218 = sphi 0, %s218
      %s220 = sphi 0, %s218
      %s221 = sphi 0, %s220
      %s235 = sphi 0, %s221
      %s239 = sphi 0, %s239
      %s241 = sphi 0, %s239
      %s242 = sphi 0, %s241
      %s256 = sphi 0, %s242
      %s264 = sphi 0, %s266
      %s267 = sphi 0, %s264
      %s268 = sphi 0, %s267
      %s284 = sphi 0, %s268
    $region4: #{tpu_custom_call.1} parent=1 // loop_header_branch
      %26 = sbr.rel (%p24) target = $region8
    $region5: #{tpu_custom_call.1} parent=1 // loop_body
      %s28 = ssub.s32 %s23, 1
      %s29 = ssub.s32 %s23, 2
      %s36 = sadd.s32 1, %s31
      %p37 = scmp.ge.s32.totalorder %s36, 4
      %s38 = scalar_select %p37, 0, %s36
      %s39 = sadd.s32 1, %s30
      %s40 = scalar_select %p37, %s39, %s30
      %p41 = scmp.ge.s32.totalorder %s40, 2
      %s42 = scalar_select %p41, 0, %s40
      %s43 = ssub.s32 %s30, %s42
      %s44 = ssub.s32 %s31, %s38
      %s45 = sor.u32 %s43, %s44
      %p46 = scmp.eq.s32.totalorder %s45, 0
      %s48 = sadd.s32 %s47, 1
      %s49 = scalar_select %p46, %s47, %s48
      %p52 = pneg %p46
      %p53 = scmp.eq.s32.totalorder %s23, 7
      %p54 = por %p52, %p53
      %p55 = scmp.ne.s32.totalorder %s47, %s50
      %p56 = scmp.eq.s32.totalorder %s23, 0
      %p57 = por %p55, %p56
      %p58 = scmp.ne.s32.totalorder %s47, %s50
      %p59 = scmp.eq.s32.totalorder %s28, 7
      %p60 = por %p58, %p59
      %p61 = scmp.ne.s32.totalorder %s50, %s51
      %p62 = scmp.eq.s32.totalorder %s28, 0
      %p63 = por %p61, %p62
      %p64 = scmp.ne.s32.totalorder %s50, %s51
      %p65 = scmp.eq.s32.totalorder %s29, 7
      %p66 = por %p64, %p65
      %p68 = scmp.ne.s32.totalorder %s51, %s67
      %p69 = scmp.eq.s32.totalorder %s29, 0
      %p70 = por %p68, %p69
      %s72 = sadd.s32 %s71, 1
      %p75 = scmp.eq.s32.totalorder %s23, 7
      %p76 = scmp.ne.s32.totalorder %s71, %s73
      %p77 = scmp.eq.s32.totalorder %s23, 0
      %p78 = por %p76, %p77
      %p79 = scmp.ne.s32.totalorder %s71, %s73
      %p80 = scmp.eq.s32.totalorder %s28, 7
      %p81 = por %p79, %p80
      %p82 = scmp.ne.s32.totalorder %s73, %s74
      %p83 = scmp.eq.s32.totalorder %s28, 0
      %p84 = por %p82, %p83
      %p85 = scmp.ne.s32.totalorder %s73, %s74
      %p86 = scmp.eq.s32.totalorder %s29, 7
      %p87 = por %p85, %p86
      %p89 = scmp.ne.s32.totalorder %s74, %s88
      %p90 = scmp.eq.s32.totalorder %s29, 0
      %p91 = por %p89, %p90
      %s93 = sadd.s32 %s92, 1
      %p96 = scmp.eq.s32.totalorder %s23, 7
      %p97 = scmp.ne.s32.totalorder %s92, %s94
      %p98 = scmp.eq.s32.totalorder %s23, 0
      %p99 = por %p97, %p98
      %p100 = scmp.ne.s32.totalorder %s92, %s94
      %p101 = scmp.eq.s32.totalorder %s28, 7
      %p102 = por %p100, %p101
      %p103 = scmp.ne.s32.totalorder %s94, %s95
      %p104 = scmp.eq.s32.totalorder %s28, 0
      %p105 = por %p103, %p104
      %p106 = scmp.ne.s32.totalorder %s94, %s95
      %p107 = scmp.eq.s32.totalorder %s29, 7
      %p108 = por %p106, %p107
      %p110 = scmp.ne.s32.totalorder %s95, %s109
      %p111 = scmp.eq.s32.totalorder %s29, 0
      %p112 = por %p110, %p111
      %s114 = sadd.s32 %s113, 1
      %p117 = scmp.eq.s32.totalorder %s23, 7
      %p118 = scmp.ne.s32.totalorder %s113, %s115
      %p119 = scmp.eq.s32.totalorder %s23, 0
      %p120 = por %p118, %p119
      %p121 = scmp.ne.s32.totalorder %s113, %s115
      %p122 = scmp.eq.s32.totalorder %s28, 7
      %p123 = por %p121, %p122
      %p124 = scmp.ne.s32.totalorder %s115, %s116
      %p125 = scmp.eq.s32.totalorder %s28, 0
      %p126 = por %p124, %p125
      %p127 = scmp.ne.s32.totalorder %s115, %s116
      %p128 = scmp.eq.s32.totalorder %s29, 7
      %p129 = por %p127, %p128
      %p131 = scmp.ne.s32.totalorder %s116, %s130
      %p132 = scmp.eq.s32.totalorder %s29, 0
      %p133 = por %p131, %p132
      %s135 = sadd.s32 %s134, 1
      %p138 = scmp.eq.s32.totalorder %s23, 7
      %p139 = scmp.ne.s32.totalorder %s134, %s136
      %p140 = scmp.eq.s32.totalorder %s23, 0
      %p141 = por %p139, %p140
      %p142 = scmp.ne.s32.totalorder %s134, %s136
      %p143 = scmp.eq.s32.totalorder %s28, 7
      %p144 = por %p142, %p143
      %p145 = scmp.ne.s32.totalorder %s136, %s137
      %p146 = scmp.eq.s32.totalorder %s28, 0
      %p147 = por %p145, %p146
      %p148 = scmp.ne.s32.totalorder %s136, %s137
      %p149 = scmp.eq.s32.totalorder %s29, 7
      %p150 = por %p148, %p149
      %p152 = scmp.ne.s32.totalorder %s137, %s151
      %p153 = scmp.eq.s32.totalorder %s29, 0
      %p154 = por %p152, %p153
      %s156 = sadd.s32 %s155, 1
      %p159 = scmp.eq.s32.totalorder %s23, 7
      %p160 = scmp.ne.s32.totalorder %s155, %s157
      %p161 = scmp.eq.s32.totalorder %s23, 0
      %p162 = por %p160, %p161
      %p163 = scmp.ne.s32.totalorder %s155, %s157
      %p164 = scmp.eq.s32.totalorder %s28, 7
      %p165 = por %p163, %p164
      %p166 = scmp.ne.s32.totalorder %s157, %s158
      %p167 = scmp.eq.s32.totalorder %s28, 0
      %p168 = por %p166, %p167
      %p169 = scmp.ne.s32.totalorder %s157, %s158
      %p170 = scmp.eq.s32.totalorder %s29, 7
      %p171 = por %p169, %p170
      %p173 = scmp.ne.s32.totalorder %s158, %s172
      %p174 = scmp.eq.s32.totalorder %s29, 0
      %p175 = por %p173, %p174
      %s177 = sadd.s32 %s176, 1
      %p180 = scmp.eq.s32.totalorder %s23, 7
      %p181 = scmp.ne.s32.totalorder %s176, %s178
      %p182 = scmp.eq.s32.totalorder %s23, 0
      %p183 = por %p181, %p182
      %p184 = scmp.ne.s32.totalorder %s176, %s178
      %p185 = scmp.eq.s32.totalorder %s28, 7
      %p186 = por %p184, %p185
      %p187 = scmp.ne.s32.totalorder %s178, %s179
      %p188 = scmp.eq.s32.totalorder %s28, 0
      %p189 = por %p187, %p188
      %p190 = scmp.ne.s32.totalorder %s178, %s179
      %p191 = scmp.eq.s32.totalorder %s29, 7
      %p192 = por %p190, %p191
      %p194 = scmp.ne.s32.totalorder %s179, %s193
      %p195 = scmp.eq.s32.totalorder %s29, 0
      %p196 = por %p194, %p195
      %s198 = sadd.s32 %s197, 1
      %p201 = scmp.eq.s32.totalorder %s23, 7
      %p202 = scmp.ne.s32.totalorder %s197, %s199
      %p203 = scmp.eq.s32.totalorder %s23, 0
      %p204 = por %p202, %p203
      %p205 = scmp.ne.s32.totalorder %s197, %s199
      %p206 = scmp.eq.s32.totalorder %s28, 7
      %p207 = por %p205, %p206
      %p208 = scmp.ne.s32.totalorder %s199, %s200
      %p209 = scmp.eq.s32.totalorder %s28, 0
      %p210 = por %p208, %p209
      %p211 = scmp.ne.s32.totalorder %s199, %s200
      %p212 = scmp.eq.s32.totalorder %s29, 7
      %p213 = por %p211, %p212
      %p215 = scmp.ne.s32.totalorder %s200, %s214
      %p216 = scmp.eq.s32.totalorder %s29, 0
      %p217 = por %p215, %p216
      %s219 = sadd.s32 %s218, 1
      %p222 = scmp.eq.s32.totalorder %s23, 7
      %p223 = scmp.ne.s32.totalorder %s218, %s220
      %p224 = scmp.eq.s32.totalorder %s23, 0
      %p225 = por %p223, %p224
      %p226 = scmp.ne.s32.totalorder %s218, %s220
      %p227 = scmp.eq.s32.totalorder %s28, 7
      %p228 = por %p226, %p227
      %p229 = scmp.ne.s32.totalorder %s220, %s221
      %p230 = scmp.eq.s32.totalorder %s28, 0
      %p231 = por %p229, %p230
      %p232 = scmp.ne.s32.totalorder %s220, %s221
      %p233 = scmp.eq.s32.totalorder %s29, 7
      %p234 = por %p232, %p233
      %p236 = scmp.ne.s32.totalorder %s221, %s235
      %p237 = scmp.eq.s32.totalorder %s29, 0
      %p238 = por %p236, %p237
      %s240 = sadd.s32 %s239, 1
      %p243 = scmp.eq.s32.totalorder %s23, 7
      %p244 = scmp.ne.s32.totalorder %s239, %s241
      %p245 = scmp.eq.s32.totalorder %s23, 0
      %p246 = por %p244, %p245
      %p247 = scmp.ne.s32.totalorder %s239, %s241
      %p248 = scmp.eq.s32.totalorder %s28, 7
      %p249 = por %p247, %p248
      %p250 = scmp.ne.s32.totalorder %s241, %s242
      %p251 = scmp.eq.s32.totalorder %s28, 0
      %p252 = por %p250, %p251
      %p253 = scmp.ne.s32.totalorder %s241, %s242
      %p254 = scmp.eq.s32.totalorder %s29, 7
      %p255 = por %p253, %p254
      %p257 = scmp.ne.s32.totalorder %s242, %s256
      %p258 = scmp.eq.s32.totalorder %s29, 0
      %p259 = por %p257, %p258
      %s260 = ssub.s32 %s30, %s42
      %s261 = ssub.s32 %s31, %s38
      %s262 = sor.u32 %s260, %s261
      %p263 = scmp.eq.s32.totalorder %s262, 0
      %s265 = sadd.s32 %s264, 1
      %s266 = scalar_select %p263, %s264, %s265
      %p269 = pneg %p263
      %p270 = scmp.eq.s32.totalorder %s23, 7
      %p271 = por %p269, %p270
      %p272 = scmp.ne.s32.totalorder %s264, %s267
      %p273 = scmp.eq.s32.totalorder %s23, 0
      %p274 = por %p272, %p273
      %p275 = scmp.ne.s32.totalorder %s264, %s267
      %p276 = scmp.eq.s32.totalorder %s28, 7
      %p277 = por %p275, %p276
      %p278 = scmp.ne.s32.totalorder %s267, %s268
      %p279 = scmp.eq.s32.totalorder %s28, 0
      %p280 = por %p278, %p279
      %p281 = scmp.ne.s32.totalorder %s267, %s268
      %p282 = scmp.eq.s32.totalorder %s29, 7
      %p283 = por %p281, %p282
      %p285 = scmp.ne.s32.totalorder %s268, %s284
      %p286 = scmp.eq.s32.totalorder %s29, 0
      %p287 = por %p285, %p286
      %p288 = scmp.le.s32.totalorder 1, %s23
      %p289 = scmp.lt.s32.totalorder %s23, 9
      %p290 = pnand %p288, %p289
      %p291 = pneg %p290
      // Predicated region
      $region9: #{tpu_custom_call.1} parent=5 // pred_check
        _
      $region10: #{tpu_custom_call.1} parent=5 // pred_check_branch
        %293 = sbr.rel (%p290) target = $region12
      $region11: #{tpu_custom_call.1} parent=5 // pred_region
        %s294 = ssub.s32 %s23, 1
        // Predicated region
        $region13: #{tpu_custom_call.1} parent=11 // pred_check
          %p295 = pneg %p84
        $region14: #{tpu_custom_call.1} parent=11 // pred_check_branch
          %297 = sbr.rel (%p295) target = $region16
        $region15: #{tpu_custom_call.1} parent=11 // pred_region
          _
        $region16: #{tpu_custom_call.1} parent=11 // pred_fallthru
          _
        // Predicated region
        $region17: #{tpu_custom_call.1} parent=11 // pred_check
          %p298 = pneg %p105
        $region18: #{tpu_custom_call.1} parent=11 // pred_check_branch
          %300 = sbr.rel (%p298) target = $region20
        $region19: #{tpu_custom_call.1} parent=11 // pred_region
          _
        $region20: #{tpu_custom_call.1} parent=11 // pred_fallthru
          _
        // Predicated region
        $region21: #{tpu_custom_call.1} parent=11 // pred_check
          %p301 = pneg %p126
        $region22: #{tpu_custom_call.1} parent=11 // pred_check_branch
          %303 = sbr.rel (%p301) target = $region24
        $region23: #{tpu_custom_call.1} parent=11 // pred_region
          _
        $region24: #{tpu_custom_call.1} parent=11 // pred_fallthru
          _
        // Predicated region
        $region25: #{tpu_custom_call.1} parent=11 // pred_check
          %p304 = pneg %p147
        $region26: #{tpu_custom_call.1} parent=11 // pred_check_branch
          %306 = sbr.rel (%p304) target = $region28
        $region27: #{tpu_custom_call.1} parent=11 // pred_region
          _
        $region28: #{tpu_custom_call.1} parent=11 // pred_fallthru
          _
        // Predicated region
        $region29: #{tpu_custom_call.1} parent=11 // pred_check
          %p307 = pneg %p168
        $region30: #{tpu_custom_call.1} parent=11 // pred_check_branch
          %309 = sbr.rel (%p307) target = $region32
        $region31: #{tpu_custom_call.1} parent=11 // pred_region
          _
        $region32: #{tpu_custom_call.1} parent=11 // pred_fallthru
          _
        // Predicated region
        $region33: #{tpu_custom_call.1} parent=11 // pred_check
          %p310 = pneg %p189
        $region34: #{tpu_custom_call.1} parent=11 // pred_check_branch
          %312 = sbr.rel (%p310) target = $region36
        $region35: #{tpu_custom_call.1} parent=11 // pred_region
          _
        $region36: #{tpu_custom_call.1} parent=11 // pred_fallthru
          _
        // Predicated region
        $region37: #{tpu_custom_call.1} parent=11 // pred_check
          %p313 = pneg %p210
        $region38: #{tpu_custom_call.1} parent=11 // pred_check_branch
          %315 = sbr.rel (%p313) target = $region40
        $region39: #{tpu_custom_call.1} parent=11 // pred_region
          _
        $region40: #{tpu_custom_call.1} parent=11 // pred_fallthru
          _
        // Predicated region
        $region41: #{tpu_custom_call.1} parent=11 // pred_check
          %p316 = pneg %p231
        $region42: #{tpu_custom_call.1} parent=11 // pred_check_branch
          %318 = sbr.rel (%p316) target = $region44
        $region43: #{tpu_custom_call.1} parent=11 // pred_region
          _
        $region44: #{tpu_custom_call.1} parent=11 // pred_fallthru
          _
        // Predicated region
        $region45: #{tpu_custom_call.1} parent=11 // pred_check
          %p319 = pneg %p252
        $region46: #{tpu_custom_call.1} parent=11 // pred_check_branch
          %321 = sbr.rel (%p319) target = $region48
        $region47: #{tpu_custom_call.1} parent=11 // pred_region
          _
        $region48: #{tpu_custom_call.1} parent=11 // pred_fallthru
          _
      $region12: #{tpu_custom_call.1} parent=5 // pred_fallthru
        _
      %p322 = scmp.lt.s32.totalorder %s23, 8
      // Predicated region
      $region49: #{tpu_custom_call.1} parent=5 // pred_check
        %p323 = pneg %p322
      $region50: #{tpu_custom_call.1} parent=5 // pred_check_branch
        %325 = sbr.rel (%p323) target = $region52
      $region51: #{tpu_custom_call.1} parent=5 // pred_region
        // Predicated region
        $region53: #{tpu_custom_call.1} parent=51 // pred_check
          %p326 = pneg %p57
        $region54: #{tpu_custom_call.1} parent=51 // pred_check_branch
          %328 = sbr.rel (%p326) target = $region56
        $region55: #{tpu_custom_call.1} parent=51 // pred_region
          %s329 = sand.u32 %s47, 1
          %s330 = scalar_lea.sflag [#allocation6], %s329
          %s331 = sand.u32 %s47, 1
          %s332 = smul.addr %s331, 64
          %s333 = scalar_lea.vmem [#allocation5], %s332
          %s334 = smul.u32 4, %s31
          %s336 = ssub.s32 1024, 1024
          %337 = vsyncadd %s330, %s336
          %s338 = smul.addr %s334, 2
          %s339 = smul.addr %s30, 32
          %s340 = sadd.s32 %s338, %s339
          %s341 = smul.addr %s340, 128
          %s342 = scalar_lea.hbm %s1, %s341
          %s343 = sshll.u32 %s333, 4
          %s344 = int_to_ptr.vmem [resolvable:$true] %s343
          %349 = dma.hbm_to_vmem [thread:$0]  %s342, 1024, %s344, %s330, 128, 128, 8
        $region56: #{tpu_custom_call.1} parent=51 // pred_fallthru
          _
      $region52: #{tpu_custom_call.1} parent=5 // pred_fallthru
        _
      %p350 = scmp.le.s32.totalorder 1, %s23
      %p351 = scmp.lt.s32.totalorder %s23, 9
      %p352 = pnand %p350, %p351
      %p353 = pneg %p352
      // Predicated region
      $region57: #{tpu_custom_call.1} parent=5 // pred_check
        _
      $region58: #{tpu_custom_call.1} parent=5 // pred_check_branch
        %355 = sbr.rel (%p352) target = $region60
      $region59: #{tpu_custom_call.1} parent=5 // pred_region
        %s356 = ssub.s32 %s23, 1
        %s357 = sand.u32 %s50, 1
        %s358 = scalar_lea.sflag [#allocation6], %s357
        %s359 = sand.u32 %s50, 1
        %s360 = smul.addr %s359, 64
        %s361 = scalar_lea.vmem [#allocation5], %s360
        // Predicated region
        $region61: #{tpu_custom_call.1} parent=59 // pred_check
          %p362 = pneg %p63
        $region62: #{tpu_custom_call.1} parent=59 // pred_check_branch
          %364 = sbr.rel (%p362) target = $region64
        $region63: #{tpu_custom_call.1} parent=59 // pred_region
          %365 = dma.done %s358, 1024
        $region64: #{tpu_custom_call.1} parent=59 // pred_fallthru
          _
        %s366 = sand.u32 %s50, 1
        %s367 = scalar_lea.sflag [#allocation6], %s366
        %s368 = sand.u32 %s50, 1
        %s369 = smul.addr %s368, 64
        %s370 = scalar_lea.vmem [#allocation5], %s369
        %p371 = pneg %p63
        %p372 = pneg %p60
        %p373 = pneg %p84
        %p374 = pneg %p81
        %p375 = pneg %p105
        %p376 = pneg %p102
        %p377 = pneg %p126
        %p378 = pneg %p123
        %p379 = pneg %p147
        %p380 = pneg %p144
        %p381 = pneg %p168
        %p382 = pneg %p165
        %p383 = pneg %p189
        %p384 = pneg %p186
        %p385 = pneg %p210
        %p386 = pneg %p207
        %p387 = pneg %p231
        %p388 = pneg %p228
        %p389 = pneg %p252
        %p390 = pneg %p249
        %p391 = pneg %p280
        %p392 = pneg %p277
        %s393 = sand.u32 %s267, 1
        %s394 = scalar_lea.sflag [#allocation7], %s393
        %s395 = sand.u32 %s267, 1
        %s396 = smul.addr %s395, 64
        %s397 = scalar_lea.vmem [#allocation8], %s396
        %s398 = smul.u32 4, %s33
        %s399 = smul.u32 4, %s33
        %s401 = smul.u32 %s33, 4
        %p402 = scmp.gt.s32.totalorder %s33, 0
        // Predicated region
        $region65: #{tpu_custom_call.1} parent=59 // pred_check
          %p403 = pneg %p402
        $region66: #{tpu_custom_call.1} parent=59 // pred_check_branch
          %405 = sbr.rel (%p403) target = $region68
        $region67: #{tpu_custom_call.1} parent=59 // pred_region
          %s406 = ssub.s32 %s401, 1
          %s407 = smul.u32 %s406, 16
          %s408 = smul.u32 %s32, 256
          %s409 = sadd.s32 %s407, %s408
          %s410 = smul.addr %s409, 16
          %s411 = scalar_lea.hbm %s0, %s410
          // Predicated region
          $region69: #{tpu_custom_call.1} parent=67 // pred_check
            _
          $region70: #{tpu_custom_call.1} parent=67 // pred_check_branch
            %413 = sbr.rel target = $region72
          $region71: #{tpu_custom_call.1} parent=67 // pred_region
            %414 = sst [smem:[#allocation11]] [#allocation10]
            %415 = sst [smem:[#allocation12]] [#allocation9]
          $region72: #{tpu_custom_call.1} parent=67 // pred_fallthru
            _
          %417 = shalt.err (0)
          %s419 = sshll.u32 [#allocation2], 4
          %s420 = int_to_ptr.vmem [resolvable:$true] %s419
          %422 = dma.hbm_to_vmem [thread:$0]  %s411, 256, %s420, [#allocation4]
        $region68: #{tpu_custom_call.1} parent=59 // pred_fallthru
          _
        %p423 = scmp.lt.s32.totalorder %s33, 3
        // Predicated region
        $region73: #{tpu_custom_call.1} parent=59 // pred_check
          %p424 = pneg %p423
        $region74: #{tpu_custom_call.1} parent=59 // pred_check_branch
          %426 = sbr.rel (%p424) target = $region76
        $region75: #{tpu_custom_call.1} parent=59 // pred_region
          %s427 = sadd.s32 %s401, 4
          %s428 = smul.u32 %s427, 16
          %s429 = smul.u32 %s32, 256
          %s430 = sadd.s32 %s428, %s429
          %s431 = smul.addr %s430, 16
          %s432 = scalar_lea.hbm %s0, %s431
          %s433 = scalar_lea.vmem [#allocation2], 16
          %s434 = scalar_lea.sflag [#allocation4], 1
          // Predicated region
          $region77: #{tpu_custom_call.1} parent=75 // pred_check
            _
          $region78: #{tpu_custom_call.1} parent=75 // pred_check_branch
            %436 = sbr.rel target = $region80
          $region79: #{tpu_custom_call.1} parent=75 // pred_region
            %437 = sst [smem:[#allocation11]] [#allocation14]
            %438 = sst [smem:[#allocation12]] [#allocation13]
          $region80: #{tpu_custom_call.1} parent=75 // pred_fallthru
            _
          %440 = shalt.err (0)
          %s442 = sshll.u32 %s433, 4
          %s443 = int_to_ptr.vmem [resolvable:$true] %s442
          %445 = dma.hbm_to_vmem [thread:$0]  %s432, 256, %s443, %s434
        $region76: #{tpu_custom_call.1} parent=59 // pred_fallthru
          _
        %v446 = vld [vmem:[%s5] sm:$0x1]
        %v447 = vld [vmem:[%s6] sm:$0x1]
        %v448 = vld [vmem:[%s7] sm:$0x1]
        %v449 = vld [vmem:[%s8] sm:$0x1]
        %v450 = vld [vmem:[%s9] sm:$0x1]
        %v451 = vld [vmem:[%s10] sm:$0x1]
        %v452 = vld [vmem:[%s2] sm:$0xf]
        %v453 = vld [vmem:[%s2 + $0x4] sm:$0xf]
        %v454 = vld [vmem:[%s4] sm:$0x3]
        %v455 = vld [vmem:[%s361] sm:$0xff]
        %v456 = vld [vmem:[%s361 + $0x8] sm:$0xff]
        %v457 = vld [vmem:[%s361 + $0x10] sm:$0xff]
        %v458 = vld [vmem:[%s361 + $0x18] sm:$0xff]
        %v459 = vld [vmem:[%s361 + $0x20] sm:$0xff]
        %v460 = vld [vmem:[%s361 + $0x28] sm:$0xff]
        %v461 = vld [vmem:[%s361 + $0x30] sm:$0xff]
        %v462 = vld [vmem:[%s361 + $0x38] sm:$0xff]
        %v463 = vpack.c.bf16 %v456, %v455
        %v464 = vpack.c.bf16 %v458, %v457
        %v465 = vpack.c.bf16 %v460, %v459
        %v466 = vpack.c.bf16 %v462, %v461
        %v469 = vunpack.c.l.b16 %v452
        %v470 = vunpack.c.l.b16 %v453
        %v471 = vpack.c.b16 %v470, %v469
        %vm473 = vcmask 130048
        %v475 = vsel %vm473, %v463, 0
        %v478 = vsel %vm473, %v464, 0
        %v481 = vsel %vm473, %v465, 0
        %v484 = vsel %vm473, %v466, 0
        %486 = vmatprep.subr.bf16.mxu0 0
        %487 = vmatpush1.bf16.msra.mxu0 %v471
        %488 = vmatprep.subr.bf16.mxu0 0
        %489 = vmatpush1.bf16.msra.mxu0 0
        %490 = vmatprep.subr.bf16.mxu0 0
        %491 = vmatpush1.bf16.msra.mxu0 0
        %492 = vmatprep.subr.bf16.mxu0 0
        %493 = vmatpush1.bf16.msra.mxu0 0
        %494 = vmatprep.subr.bf16.mxu0 0
        %495 = vmatpush1.bf16.msra.mxu0 0
        %496 = vmatprep.subr.bf16.mxu0 0
        %497 = vmatpush1.bf16.msra.mxu0 0
        %498 = vmatprep.subr.bf16.mxu0 0
        %499 = vmatpush1.bf16.msra.mxu0 0
        %500 = vmatprep.subr.bf16.mxu0 0
        %501 = vmatpush1.bf16.msra.mxu0 0
        %502 = vmatprep.subr.bf16.mxu0 0
        %503 = vmatpush1.bf16.msra.mxu0 0
        %504 = vmatprep.subr.bf16.mxu0 0
        %505 = vmatpush1.bf16.msra.mxu0 0
        %506 = vmatprep.subr.bf16.mxu0 0
        %507 = vmatpush1.bf16.msra.mxu0 0
        %508 = vmatprep.subr.bf16.mxu0 0
        %509 = vmatpush1.bf16.msra.mxu0 0
        %510 = vmatprep.subr.bf16.mxu0 0
        %511 = vmatpush1.bf16.msra.mxu0 0
        %512 = vmatprep.subr.bf16.mxu0 0
        %513 = vmatpush1.bf16.msra.mxu0 0
        %514 = vmatprep.subr.bf16.mxu0 0
        %515 = vmatpush1.bf16.msra.mxu0 0
        %516 = vmatprep.subr.bf16.mxu0 0
        %517 = vmatpush1.bf16.msra.mxu0 0
        %518 = vmatprep.mubr.bf16.mxu0 0
        %519 = vmatmul.mubr.bf16.gmra.mrb[0].mxu0 %v475
        %v520 = vpop.f32.mrb[0].mxu0
        %v521 = vadd.f32 0.0, %v520
        %v522 = vpop.f32.mrb[0].mxu0
        %v523 = vpop.f32.mrb[0].mxu0
        %v524 = vadd.f32 0.0, %v523
        %v525 = vpop.f32.mrb[0].mxu0
        %526 = vmatprep.mubr.bf16.mxu0 0
        %527 = vmatmul.mubr.bf16.gmra.mrb[0].mxu0 %v478
        %v528 = vpop.f32.mrb[0].mxu0
        %v529 = vadd.f32 0.0, %v528
        %v530 = vpop.f32.mrb[0].mxu0
        %v531 = vpop.f32.mrb[0].mxu0
        %v532 = vadd.f32 0.0, %v531
        %v533 = vpop.f32.mrb[0].mxu0
        %534 = vmatprep.mubr.bf16.mxu0 0
        %535 = vmatmul.mubr.bf16.gmra.mrb[0].mxu0 %v481
        %v536 = vpop.f32.mrb[0].mxu0
        %v537 = vadd.f32 0.0, %v536
        %v538 = vpop.f32.mrb[0].mxu0
        %v539 = vpop.f32.mrb[0].mxu0
        %v540 = vadd.f32 0.0, %v539
        %v541 = vpop.f32.mrb[0].mxu0
        %542 = vmatprep.mubr.bf16.mxu0 0
        %543 = vmatmul.mubr.bf16.gmra.mrb[0].mxu0 %v484
        %v544 = vpop.f32.mrb[0].mxu0
        %v545 = vadd.f32 0.0, %v544
        %v546 = vpop.f32.mrb[0].mxu0
        %v547 = vpop.f32.mrb[0].mxu0
        %v548 = vadd.f32 0.0, %v547
        %v549 = vpop.f32.mrb[0].mxu0
        %550 = vdwg.mxu0
        %v552 = vlaneseq
        %v553 = vshrl.u32 %v552, 7
        %v554 = vsub.s32 0, %v553
        %v555 = vrot.slane %v446, %v554
        %v557 = vmul.f32 %v521, %v555
        %v558 = vmul.f32 %v524, %v555
        %v559 = vmul.f32 %v529, %v555
        %v560 = vmul.f32 %v532, %v555
        %v561 = vmul.f32 %v537, %v555
        %v562 = vmul.f32 %v540, %v555
        %v563 = vmul.f32 %v545, %v555
        %v564 = vmul.f32 %v548, %v555
        %v566 = vlaneseq
        %v567 = vshrl.u32 %v566, 7
        %v568 = vsub.s32 0, %v567
        %v569 = vrot.slane %v447, %v568
        %v571 = vadd.f32 %v557, %v569
        %v572 = vadd.f32 %v558, %v569
        %v573 = vadd.f32 %v559, %v569
        %v574 = vadd.f32 %v560, %v569
        %v575 = vadd.f32 %v561, %v569
        %v576 = vadd.f32 %v562, %v569
        %v577 = vadd.f32 %v563, %v569
        %v578 = vadd.f32 %v564, %v569
        %v579 = vmax.f32 %v571, 0.0
        %v580 = vmax.f32 %v572, 0.0
        %v581 = vmax.f32 %v573, 0.0
        %v582 = vmax.f32 %v574, 0.0
        %v583 = vmax.f32 %v575, 0.0
        %v584 = vmax.f32 %v576, 0.0
        %v585 = vmax.f32 %v577, 0.0
        %v586 = vmax.f32 %v578, 0.0
        %s587 = scalar_lea.vmem [#allocation3], 16
        %vm588 = vcmask 31744
        %589 = vst.msk [vmem:[%s587] sm:$0xff] %vm588, %v579
        %590 = vst.msk [vmem:[%s587 + $0x8] sm:$0xff] %vm588, %v580
        %591 = vst.msk [vmem:[%s587 + $0x10] sm:$0xff] %vm588, %v581
        %592 = vst.msk [vmem:[%s587 + $0x18] sm:$0xff] %vm588, %v582
        %593 = vst.msk [vmem:[%s587 + $0x20] sm:$0xff] %vm588, %v583
        %594 = vst.msk [vmem:[%s587 + $0x28] sm:$0xff] %vm588, %v584
        %595 = vst.msk [vmem:[%s587 + $0x30] sm:$0xff] %vm588, %v585
        %596 = vst.msk [vmem:[%s587 + $0x38] sm:$0xff] %vm588, %v586
        %p597 = scmp.eq.s32.totalorder %s33, 0
        // Predicated region
        $region81: #{tpu_custom_call.1} parent=59 // pred_check
          %p598 = pneg %p597
        $region82: #{tpu_custom_call.1} parent=59 // pred_check_branch
          %600 = sbr.rel (%p598) target = $region84
        $region83: #{tpu_custom_call.1} parent=59 // pred_region
          %601 = vst.msk [vmem:[#allocation3] sm:$0xff] %vm588, 0.0
          %602 = vst.msk [vmem:[#allocation3 + $0x8] sm:$0xff] %vm588, 0.0
        $region84: #{tpu_custom_call.1} parent=59 // pred_fallthru
          _
        // Predicated region
        $region85: #{tpu_custom_call.1} parent=59 // pred_check
          %p603 = pneg %p402
        $region86: #{tpu_custom_call.1} parent=59 // pred_check_branch
          %605 = sbr.rel (%p603) target = $region88
        $region87: #{tpu_custom_call.1} parent=59 // pred_region
          %s606 = smul.u32 16, 1
          %s607 = sshll.u32 %s606, 4
          %608 = dma.done [#allocation4], %s607
          %v609 = vld [vmem:[#allocation2] sm:$0xff]
          %v610 = vld [vmem:[#allocation2 + $0x8] sm:$0xff]
          %v611 = vpack.c.bf16 %v610, %v609
          %v613 = vsel %vm473, %v611, 0
          %615 = vmatprep.subr.bf16.mxu0 0
          %616 = vmatpush1.bf16.msra.mxu0 %v471
          %617 = vmatprep.subr.bf16.mxu0 0
          %618 = vmatpush1.bf16.msra.mxu0 0
          %619 = vmatprep.subr.bf16.mxu0 0
          %620 = vmatpush1.bf16.msra.mxu0 0
          %621 = vmatprep.subr.bf16.mxu0 0
          %622 = vmatpush1.bf16.msra.mxu0 0
          %623 = vmatprep.subr.bf16.mxu0 0
          %624 = vmatpush1.bf16.msra.mxu0 0
          %625 = vmatprep.subr.bf16.mxu0 0
          %626 = vmatpush1.bf16.msra.mxu0 0
          %627 = vmatprep.subr.bf16.mxu0 0
          %628 = vmatpush1.bf16.msra.mxu0 0
          %629 = vmatprep.subr.bf16.mxu0 0
          %630 = vmatpush1.bf16.msra.mxu0 0
          %631 = vmatprep.subr.bf16.mxu0 0
          %632 = vmatpush1.bf16.msra.mxu0 0
          %633 = vmatprep.subr.bf16.mxu0 0
          %634 = vmatpush1.bf16.msra.mxu0 0
          %635 = vmatprep.subr.bf16.mxu0 0
          %636 = vmatpush1.bf16.msra.mxu0 0
          %637 = vmatprep.subr.bf16.mxu0 0
          %638 = vmatpush1.bf16.msra.mxu0 0
          %639 = vmatprep.subr.bf16.mxu0 0
          %640 = vmatpush1.bf16.msra.mxu0 0
          %641 = vmatprep.subr.bf16.mxu0 0
          %642 = vmatpush1.bf16.msra.mxu0 0
          %643 = vmatprep.subr.bf16.mxu0 0
          %644 = vmatpush1.bf16.msra.mxu0 0
          %645 = vmatprep.subr.bf16.mxu0 0
          %646 = vmatpush1.bf16.msra.mxu0 0
          %647 = vmatprep.mubr.bf16.mxu0 0
          %648 = vmatmul.mubr.bf16.gmra.mrb[0].mxu0 %v613
          %v649 = vpop.f32.mrb[0].mxu0
          %v650 = vadd.f32 0.0, %v649
          %v651 = vpop.f32.mrb[0].mxu0
          %v652 = vpop.f32.mrb[0].mxu0
          %v653 = vadd.f32 0.0, %v652
          %v654 = vpop.f32.mrb[0].mxu0
          %655 = vdwg.mxu0
          %v656 = vmul.f32 %v650, %v555
          %v657 = vmul.f32 %v653, %v555
          %v658 = vadd.f32 %v656, %v569
          %v659 = vadd.f32 %v657, %v569
          %v660 = vmax.f32 %v658, 0.0
          %v661 = vmax.f32 %v659, 0.0
          %662 = vst.msk [vmem:[#allocation3] sm:$0xff] %vm588, %v660
          %663 = vst.msk [vmem:[#allocation3 + $0x8] sm:$0xff] %vm588, %v661
        $region88: #{tpu_custom_call.1} parent=59 // pred_fallthru
          _
        %p664 = scmp.eq.s32.totalorder %s33, 3
        // Predicated region
        $region89: #{tpu_custom_call.1} parent=59 // pred_check
          %p665 = pneg %p664
        $region90: #{tpu_custom_call.1} parent=59 // pred_check_branch
          %667 = sbr.rel (%p665) target = $region92
        $region91: #{tpu_custom_call.1} parent=59 // pred_region
          %s668 = scalar_lea.vmem [#allocation3], 80
          %669 = vst.msk [vmem:[%s668] sm:$0xff] %vm588, 0.0
          %670 = vst.msk [vmem:[%s668 + $0x8] sm:$0xff] %vm588, 0.0
        $region92: #{tpu_custom_call.1} parent=59 // pred_fallthru
          _
        // Predicated region
        $region93: #{tpu_custom_call.1} parent=59 // pred_check
          %p671 = pneg %p423
        $region94: #{tpu_custom_call.1} parent=59 // pred_check_branch
          %673 = sbr.rel (%p671) target = $region96
        $region95: #{tpu_custom_call.1} parent=59 // pred_region
          %s674 = scalar_lea.sflag [#allocation4], 1
          %s675 = smul.u32 16, 1
          %s676 = sshll.u32 %s675, 4
          %677 = dma.done %s674, %s676
          %s678 = scalar_lea.vmem [#allocation2], 16
          %v679 = vld [vmem:[%s678] sm:$0xff]
          %v680 = vld [vmem:[%s678 + $0x8] sm:$0xff]
          %v681 = vpack.c.bf16 %v680, %v679
          %v683 = vsel %vm473, %v681, 0
          %685 = vmatprep.subr.bf16.mxu0 0
          %686 = vmatpush1.bf16.msra.mxu0 %v471
          %687 = vmatprep.subr.bf16.mxu0 0
          %688 = vmatpush1.bf16.msra.mxu0 0
          %689 = vmatprep.subr.bf16.mxu0 0
          %690 = vmatpush1.bf16.msra.mxu0 0
          %691 = vmatprep.subr.bf16.mxu0 0
          %692 = vmatpush1.bf16.msra.mxu0 0
          %693 = vmatprep.subr.bf16.mxu0 0
          %694 = vmatpush1.bf16.msra.mxu0 0
          %695 = vmatprep.subr.bf16.mxu0 0
          %696 = vmatpush1.bf16.msra.mxu0 0
          %697 = vmatprep.subr.bf16.mxu0 0
          %698 = vmatpush1.bf16.msra.mxu0 0
          %699 = vmatprep.subr.bf16.mxu0 0
          %700 = vmatpush1.bf16.msra.mxu0 0
          %701 = vmatprep.subr.bf16.mxu0 0
          %702 = vmatpush1.bf16.msra.mxu0 0
          %703 = vmatprep.subr.bf16.mxu0 0
          %704 = vmatpush1.bf16.msra.mxu0 0
          %705 = vmatprep.subr.bf16.mxu0 0
          %706 = vmatpush1.bf16.msra.mxu0 0
          %707 = vmatprep.subr.bf16.mxu0 0
          %708 = vmatpush1.bf16.msra.mxu0 0
          %709 = vmatprep.subr.bf16.mxu0 0
          %710 = vmatpush1.bf16.msra.mxu0 0
          %711 = vmatprep.subr.bf16.mxu0 0
          %712 = vmatpush1.bf16.msra.mxu0 0
          %713 = vmatprep.subr.bf16.mxu0 0
          %714 = vmatpush1.bf16.msra.mxu0 0
          %715 = vmatprep.subr.bf16.mxu0 0
          %716 = vmatpush1.bf16.msra.mxu0 0
          %717 = vmatprep.mubr.bf16.mxu0 0
          %718 = vmatmul.mubr.bf16.gmra.mrb[0].mxu0 %v683
          %v719 = vpop.f32.mrb[0].mxu0
          %v720 = vadd.f32 0.0, %v719
          %v721 = vpop.f32.mrb[0].mxu0
          %v722 = vpop.f32.mrb[0].mxu0
          %v723 = vadd.f32 0.0, %v722
          %v724 = vpop.f32.mrb[0].mxu0
          %725 = vdwg.mxu0
          %v726 = vmul.f32 %v720, %v555
          %v727 = vmul.f32 %v723, %v555
          %v728 = vadd.f32 %v726, %v569
          %v729 = vadd.f32 %v727, %v569
          %v730 = vmax.f32 %v728, 0.0
          %v731 = vmax.f32 %v729, 0.0
          %s732 = scalar_lea.vmem [#allocation3], 80
          %733 = vst.msk [vmem:[%s732] sm:$0xff] %vm588, %v730
          %734 = vst.msk [vmem:[%s732 + $0x8] sm:$0xff] %vm588, %v731
        $region96: #{tpu_custom_call.1} parent=59 // pred_fallthru
          _
        %v735 = vld [vmem:[#allocation3] sm:$0xff]
        %v736 = vld [vmem:[#allocation3 + $0x8] sm:$0xff]
        %v737 = vld [vmem:[#allocation3 + $0x10] sm:$0xff]
        %v738 = vld [vmem:[#allocation3 + $0x18] sm:$0xff]
        %v739 = vld [vmem:[#allocation3 + $0x20] sm:$0xff]
        %v740 = vld [vmem:[#allocation3 + $0x28] sm:$0xff]
        %v741 = vld [vmem:[#allocation3 + $0x30] sm:$0xff]
        %v742 = vld [vmem:[#allocation3 + $0x38] sm:$0xff]
        %vm751 = vcmask 1040384
        %v752 = vrot.slane %v735, 7
        %v753 = vrot.slane %v736, 7
        %v754 = vsel %vm751, %v752, %v753
        %v755 = vrot.slane %v737, 7
        %v756 = vrot.slane %v738, 7
        %v757 = vsel %vm751, %v755, %v756
        %v758 = vrot.slane %v739, 7
        %v759 = vrot.slane %v740, 7
        %v760 = vsel %vm751, %v758, %v759
        %v761 = vrot.slane %v741, 7
        %v762 = vrot.slane %v742, 7
        %v763 = vsel %vm751, %v761, %v762
        %v772 = vsel %vm751, 0.0, %v752
        %v773 = vsel %vm751, 0.0, %v755
        %v774 = vsel %vm751, 0.0, %v758
        %v775 = vsel %vm751, 0.0, %v761
        %vm776 = vcmask 1046528
        %v777 = vrot.slane %v735, 1
        %v778 = vrot.slane %v736, 1
        %v779 = vsel %vm776, %v777, %v778
        %v780 = vrot.slane %v737, 1
        %v781 = vrot.slane %v738, 1
        %v782 = vsel %vm776, %v780, %v781
        %v783 = vrot.slane %v739, 1
        %v784 = vrot.slane %v740, 1
        %v785 = vsel %vm776, %v783, %v784
        %v786 = vrot.slane %v741, 1
        %v787 = vrot.slane %v742, 1
        %v788 = vsel %vm776, %v786, %v787
        %v793 = vsel %vm776, %v778, 0.0
        %v794 = vsel %vm776, %v781, 0.0
        %v795 = vsel %vm776, %v784, 0.0
        %v796 = vsel %vm776, %v787, 0.0
        %797 = vrot.lane.b32.xlu0 %v735, 4
        %v798 = vpop.permute.xlu0 %797
        %799 = vrot.lane.b32.xlu0 %v736, 4
        %v800 = vpop.permute.xlu0 %799
        %801 = vrot.lane.b32.xlu0 %v737, 4
        %v802 = vpop.permute.xlu0 %801
        %803 = vrot.lane.b32.xlu0 %v738, 4
        %v804 = vpop.permute.xlu0 %803
        %805 = vrot.lane.b32.xlu0 %v739, 4
        %v806 = vpop.permute.xlu0 %805
        %807 = vrot.lane.b32.xlu0 %v740, 4
        %v808 = vpop.permute.xlu0 %807
        %809 = vrot.lane.b32.xlu0 %v741, 4
        %v810 = vpop.permute.xlu0 %809
        %811 = vrot.lane.b32.xlu0 %v742, 4
        %v812 = vpop.permute.xlu0 %811
        %825 = vrot.lane.b32.xlu0 %v779, 8
        %v826 = vpop.permute.xlu0 %825
        %827 = vrot.lane.b32.xlu0 %v793, 8
        %v828 = vpop.permute.xlu0 %827
        %829 = vrot.lane.b32.xlu0 %v782, 8
        %v830 = vpop.permute.xlu0 %829
        %831 = vrot.lane.b32.xlu0 %v794, 8
        %v832 = vpop.permute.xlu0 %831
        %833 = vrot.lane.b32.xlu0 %v785, 8
        %v834 = vpop.permute.xlu0 %833
        %835 = vrot.lane.b32.xlu0 %v795, 8
        %v836 = vpop.permute.xlu0 %835
        %837 = vrot.lane.b32.xlu0 %v788, 8
        %v838 = vpop.permute.xlu0 %837
        %839 = vrot.lane.b32.xlu0 %v796, 8
        %v840 = vpop.permute.xlu0 %839
        %v849 = vsel %vm588, %v772, %v798
        %v850 = vsel %vm588, %v754, %v800
        %v851 = vsel %vm588, %v773, %v802
        %v852 = vsel %vm588, %v757, %v804
        %v853 = vsel %vm588, %v774, %v806
        %v854 = vsel %vm588, %v760, %v808
        %v855 = vsel %vm588, %v775, %v810
        %v856 = vsel %vm588, %v763, %v812
        %vm857 = vcmask 64512
        %v858 = vsel %vm857, %v849, %v826
        %v859 = vsel %vm857, %v850, %v828
        %v860 = vsel %vm857, %v851, %v830
        %v861 = vsel %vm857, %v852, %v832
        %v862 = vsel %vm857, %v853, %v834
        %v863 = vsel %vm857, %v854, %v836
        %v864 = vsel %vm857, %v855, %v838
        %v865 = vsel %vm857, %v856, %v840
        %v866 = vpack.c.bf16 %v859, %v858
        %v867 = vpack.c.bf16 %v861, %v860
        %v868 = vpack.c.bf16 %v863, %v862
        %v869 = vpack.c.bf16 %v865, %v864
        %v870 = vld [vmem:[%s3] sm:$0xf]
        %v871 = vld [vmem:[%s3 + $0x4] sm:$0x3]
        %v872 = vld [vmem:[%s587] sm:$0xff]
        %v873 = vld [vmem:[%s587 + $0x8] sm:$0xff]
        %v874 = vld [vmem:[%s587 + $0x10] sm:$0xff]
        %v875 = vld [vmem:[%s587 + $0x18] sm:$0xff]
        %v876 = vld [vmem:[%s587 + $0x20] sm:$0xff]
        %v877 = vld [vmem:[%s587 + $0x28] sm:$0xff]
        %v878 = vld [vmem:[%s587 + $0x30] sm:$0xff]
        %v879 = vld [vmem:[%s587 + $0x38] sm:$0xff]
        %v888 = vrot.slane %v872, 7
        %v889 = vrot.slane %v873, 7
        %v890 = vsel %vm751, %v888, %v889
        %v891 = vrot.slane %v874, 7
        %v892 = vrot.slane %v875, 7
        %v893 = vsel %vm751, %v891, %v892
        %v894 = vrot.slane %v876, 7
        %v895 = vrot.slane %v877, 7
        %v896 = vsel %vm751, %v894, %v895
        %v897 = vrot.slane %v878, 7
        %v898 = vrot.slane %v879, 7
        %v899 = vsel %vm751, %v897, %v898
        %v908 = vsel %vm751, 0.0, %v888
        %v909 = vsel %vm751, 0.0, %v891
        %v910 = vsel %vm751, 0.0, %v894
        %v911 = vsel %vm751, 0.0, %v897
        %v912 = vrot.slane %v872, 1
        %v913 = vrot.slane %v873, 1
        %v914 = vsel %vm776, %v912, %v913
        %v915 = vrot.slane %v874, 1
        %v916 = vrot.slane %v875, 1
        %v917 = vsel %vm776, %v915, %v916
        %v918 = vrot.slane %v876, 1
        %v919 = vrot.slane %v877, 1
        %v920 = vsel %vm776, %v918, %v919
        %v921 = vrot.slane %v878, 1
        %v922 = vrot.slane %v879, 1
        %v923 = vsel %vm776, %v921, %v922
        %v928 = vsel %vm776, %v913, 0.0
        %v929 = vsel %vm776, %v916, 0.0
        %v930 = vsel %vm776, %v919, 0.0
        %v931 = vsel %vm776, %v922, 0.0
        %932 = vrot.lane.b32.xlu0 %v872, 4
        %v933 = vpop.permute.xlu0 %932
        %934 = vrot.lane.b32.xlu0 %v873, 4
        %v935 = vpop.permute.xlu0 %934
        %936 = vrot.lane.b32.xlu0 %v874, 4
        %v937 = vpop.permute.xlu0 %936
        %938 = vrot.lane.b32.xlu0 %v875, 4
        %v939 = vpop.permute.xlu0 %938
        %940 = vrot.lane.b32.xlu0 %v876, 4
        %v941 = vpop.permute.xlu0 %940
        %942 = vrot.lane.b32.xlu0 %v877, 4
        %v943 = vpop.permute.xlu0 %942
        %944 = vrot.lane.b32.xlu0 %v878, 4
        %v945 = vpop.permute.xlu0 %944
        %946 = vrot.lane.b32.xlu0 %v879, 4
        %v947 = vpop.permute.xlu0 %946
        %960 = vrot.lane.b32.xlu0 %v914, 8
        %v961 = vpop.permute.xlu0 %960
        %962 = vrot.lane.b32.xlu0 %v928, 8
        %v963 = vpop.permute.xlu0 %962
        %964 = vrot.lane.b32.xlu0 %v917, 8
        %v965 = vpop.permute.xlu0 %964
        %966 = vrot.lane.b32.xlu0 %v929, 8
        %v967 = vpop.permute.xlu0 %966
        %968 = vrot.lane.b32.xlu0 %v920, 8
        %v969 = vpop.permute.xlu0 %968
        %970 = vrot.lane.b32.xlu0 %v930, 8
        %v971 = vpop.permute.xlu0 %970
        %972 = vrot.lane.b32.xlu0 %v923, 8
        %v973 = vpop.permute.xlu0 %972
        %974 = vrot.lane.b32.xlu0 %v931, 8
        %v975 = vpop.permute.xlu0 %974
        %v984 = vsel %vm588, %v908, %v933
        %v985 = vsel %vm588, %v890, %v935
        %v986 = vsel %vm588, %v909, %v937
        %v987 = vsel %vm588, %v893, %v939
        %v988 = vsel %vm588, %v910, %v941
        %v989 = vsel %vm588, %v896, %v943
        %v990 = vsel %vm588, %v911, %v945
        %v991 = vsel %vm588, %v899, %v947
        %v992 = vsel %vm857, %v984, %v961
        %v993 = vsel %vm857, %v985, %v963
        %v994 = vsel %vm857, %v986, %v965
        %v995 = vsel %vm857, %v987, %v967
        %v996 = vsel %vm857, %v988, %v969
        %v997 = vsel %vm857, %v989, %v971
        %v998 = vsel %vm857, %v990, %v973
        %v999 = vsel %vm857, %v991, %v975
        %v1000 = vpack.c.bf16 %v993, %v992
        %v1001 = vpack.c.bf16 %v995, %v994
        %v1002 = vpack.c.bf16 %v997, %v996
        %v1003 = vpack.c.bf16 %v999, %v998
        %s1004 = scalar_lea.vmem %s3, 8
        %v1005 = vld [vmem:[%s1004] sm:$0xf]
        %v1006 = vld [vmem:[%s1004 + $0x4] sm:$0x3]
        %v1009 = vunpack.c.l.b16 %v1005
        %v1010 = vunpack.c.l.b16 %v1006
        %v1011 = vpack.c.b16 %v1010, %v1009
        %vm1012 = vcmask 97280
        %v1014 = vsel %vm1012, %v1000, 0
        %v1017 = vsel %vm1012, %v1001, 0
        %v1020 = vsel %vm1012, %v1002, 0
        %v1023 = vsel %vm1012, %v1003, 0
        %vm1025 = vcmask 1045504
        %v1027 = vsel %vm1025, %v1011, 0
        %1029 = vmatprep.subr.bf16.mxu0 0
        %1030 = vmatpush1.bf16.msra.mxu0 %v1027
        %1031 = vmatprep.subr.bf16.mxu0 0
        %1032 = vmatpush1.bf16.msra.mxu0 0
        %1033 = vmatprep.subr.bf16.mxu0 0
        %1034 = vmatpush1.bf16.msra.mxu0 0
        %1035 = vmatprep.subr.bf16.mxu0 0
        %1036 = vmatpush1.bf16.msra.mxu0 0
        %1037 = vmatprep.subr.bf16.mxu0 0
        %1038 = vmatpush1.bf16.msra.mxu0 0
        %1039 = vmatprep.subr.bf16.mxu0 0
        %1040 = vmatpush1.bf16.msra.mxu0 0
        %1041 = vmatprep.subr.bf16.mxu0 0
        %1042 = vmatpush1.bf16.msra.mxu0 0
        %1043 = vmatprep.subr.bf16.mxu0 0
        %1044 = vmatpush1.bf16.msra.mxu0 0
        %1045 = vmatprep.subr.bf16.mxu0 0
        %1046 = vmatpush1.bf16.msra.mxu0 0
        %1047 = vmatprep.subr.bf16.mxu0 0
        %1048 = vmatpush1.bf16.msra.mxu0 0
        %1049 = vmatprep.subr.bf16.mxu0 0
        %1050 = vmatpush1.bf16.msra.mxu0 0
        %1051 = vmatprep.subr.bf16.mxu0 0
        %1052 = vmatpush1.bf16.msra.mxu0 0
        %1053 = vmatprep.subr.bf16.mxu0 0
        %1054 = vmatpush1.bf16.msra.mxu0 0
        %1055 = vmatprep.subr.bf16.mxu0 0
        %1056 = vmatpush1.bf16.msra.mxu0 0
        %1057 = vmatprep.subr.bf16.mxu0 0
        %1058 = vmatpush1.bf16.msra.mxu0 0
        %1059 = vmatprep.subr.bf16.mxu0 0
        %1060 = vmatpush1.bf16.msra.mxu0 0
        %1061 = vmatprep.mubr.bf16.mxu0 0
        %1062 = vmatmul.mubr.bf16.gmra.mrb[0].mxu0 %v1014
        %v1063 = vpop.f32.mrb[0].mxu0
        %v1064 = vadd.f32 0.0, %v1063
        %v1065 = vpop.f32.mrb[0].mxu0
        %v1066 = vpop.f32.mrb[0].mxu0
        %v1067 = vadd.f32 0.0, %v1066
        %v1068 = vpop.f32.mrb[0].mxu0
        %1069 = vmatprep.mubr.bf16.mxu0 0
        %1070 = vmatmul.mubr.bf16.gmra.mrb[0].mxu0 %v1017
        %v1071 = vpop.f32.mrb[0].mxu0
        %v1072 = vadd.f32 0.0, %v1071
        %v1073 = vpop.f32.mrb[0].mxu0
        %v1074 = vpop.f32.mrb[0].mxu0
        %v1075 = vadd.f32 0.0, %v1074
        %v1076 = vpop.f32.mrb[0].mxu0
        %1077 = vmatprep.mubr.bf16.mxu0 0
        %1078 = vmatmul.mubr.bf16.gmra.mrb[0].mxu0 %v1020
        %v1079 = vpop.f32.mrb[0].mxu0
        %v1080 = vadd.f32 0.0, %v1079
        %v1081 = vpop.f32.mrb[0].mxu0
        %v1082 = vpop.f32.mrb[0].mxu0
        %v1083 = vadd.f32 0.0, %v1082
        %v1084 = vpop.f32.mrb[0].mxu0
        %1085 = vmatprep.mubr.bf16.mxu0 0
        %1086 = vmatmul.mubr.bf16.gmra.mrb[0].mxu0 %v1023
        %v1087 = vpop.f32.mrb[0].mxu0
        %v1088 = vadd.f32 0.0, %v1087
        %v1089 = vpop.f32.mrb[0].mxu0
        %v1090 = vpop.f32.mrb[0].mxu0
        %v1091 = vadd.f32 0.0, %v1090
        %v1092 = vpop.f32.mrb[0].mxu0
        %1093 = vdwg.mxu0
        %v1096 = vunpack.c.l.b16 %v870
        %v1097 = vunpack.c.l.b16 %v871
        %v1098 = vpack.c.b16 %v1097, %v1096
        %v1100 = vsel %vm1012, %v866, 0
        %v1103 = vsel %vm1012, %v867, 0
        %v1106 = vsel %vm1012, %v868, 0
        %v1109 = vsel %vm1012, %v869, 0
        %v1112 = vsel %vm1025, %v1098, 0
        %1114 = vmatprep.subr.bf16.mxu0 0
        %1115 = vmatpush1.bf16.msra.mxu0 %v1112
        %1116 = vmatprep.subr.bf16.mxu0 0
        %1117 = vmatpush1.bf16.msra.mxu0 0
        %1118 = vmatprep.subr.bf16.mxu0 0
        %1119 = vmatpush1.bf16.msra.mxu0 0
        %1120 = vmatprep.subr.bf16.mxu0 0
        %1121 = vmatpush1.bf16.msra.mxu0 0
        %1122 = vmatprep.subr.bf16.mxu0 0
        %1123 = vmatpush1.bf16.msra.mxu0 0
        %1124 = vmatprep.subr.bf16.mxu0 0
        %1125 = vmatpush1.bf16.msra.mxu0 0
        %1126 = vmatprep.subr.bf16.mxu0 0
        %1127 = vmatpush1.bf16.msra.mxu0 0
        %1128 = vmatprep.subr.bf16.mxu0 0
        %1129 = vmatpush1.bf16.msra.mxu0 0
        %1130 = vmatprep.subr.bf16.mxu0 0
        %1131 = vmatpush1.bf16.msra.mxu0 0
        %1132 = vmatprep.subr.bf16.mxu0 0
        %1133 = vmatpush1.bf16.msra.mxu0 0
        %1134 = vmatprep.subr.bf16.mxu0 0
        %1135 = vmatpush1.bf16.msra.mxu0 0
        %1136 = vmatprep.subr.bf16.mxu0 0
        %1137 = vmatpush1.bf16.msra.mxu0 0
        %1138 = vmatprep.subr.bf16.mxu0 0
        %1139 = vmatpush1.bf16.msra.mxu0 0
        %1140 = vmatprep.subr.bf16.mxu0 0
        %1141 = vmatpush1.bf16.msra.mxu0 0
        %1142 = vmatprep.subr.bf16.mxu0 0
        %1143 = vmatpush1.bf16.msra.mxu0 0
        %1144 = vmatprep.subr.bf16.mxu0 0
        %1145 = vmatpush1.bf16.msra.mxu0 0
        %1146 = vmatprep.mubr.bf16.mxu0 0
        %1147 = vmatmul.mubr.bf16.gmra.mrb[0].mxu0 %v1100
        %v1148 = vpop.f32.mrb[0].mxu0
        %v1149 = vadd.f32 %v1064, %v1148
        %v1150 = vpop.f32.mrb[0].mxu0
        %v1151 = vpop.f32.mrb[0].mxu0
        %v1152 = vadd.f32 %v1067, %v1151
        %v1153 = vpop.f32.mrb[0].mxu0
        %1154 = vmatprep.mubr.bf16.mxu0 0
        %1155 = vmatmul.mubr.bf16.gmra.mrb[0].mxu0 %v1103
        %v1156 = vpop.f32.mrb[0].mxu0
        %v1157 = vadd.f32 %v1072, %v1156
        %v1158 = vpop.f32.mrb[0].mxu0
        %v1159 = vpop.f32.mrb[0].mxu0
        %v1160 = vadd.f32 %v1075, %v1159
        %v1161 = vpop.f32.mrb[0].mxu0
        %1162 = vmatprep.mubr.bf16.mxu0 0
        %1163 = vmatmul.mubr.bf16.gmra.mrb[0].mxu0 %v1106
        %v1164 = vpop.f32.mrb[0].mxu0
        %v1165 = vadd.f32 %v1080, %v1164
        %v1166 = vpop.f32.mrb[0].mxu0
        %v1167 = vpop.f32.mrb[0].mxu0
        %v1168 = vadd.f32 %v1083, %v1167
        %v1169 = vpop.f32.mrb[0].mxu0
        %1170 = vmatprep.mubr.bf16.mxu0 0
        %1171 = vmatmul.mubr.bf16.gmra.mrb[0].mxu0 %v1109
        %v1172 = vpop.f32.mrb[0].mxu0
        %v1173 = vadd.f32 %v1088, %v1172
        %v1174 = vpop.f32.mrb[0].mxu0
        %v1175 = vpop.f32.mrb[0].mxu0
        %v1176 = vadd.f32 %v1091, %v1175
        %v1177 = vpop.f32.mrb[0].mxu0
        %1178 = vdwg.mxu0
        %s1179 = scalar_lea.vmem [#allocation3], 32
        %v1180 = vld [vmem:[%s1179] sm:$0xff]
        %v1181 = vld [vmem:[%s1179 + $0x8] sm:$0xff]
        %v1182 = vld [vmem:[%s1179 + $0x10] sm:$0xff]
        %v1183 = vld [vmem:[%s1179 + $0x18] sm:$0xff]
        %v1184 = vld [vmem:[%s1179 + $0x20] sm:$0xff]
        %v1185 = vld [vmem:[%s1179 + $0x28] sm:$0xff]
        %v1186 = vld [vmem:[%s1179 + $0x30] sm:$0xff]
        %v1187 = vld [vmem:[%s1179 + $0x38] sm:$0xff]
        %v1196 = vrot.slane %v1180, 7
        %v1197 = vrot.slane %v1181, 7
        %v1198 = vsel %vm751, %v1196, %v1197
        %v1199 = vrot.slane %v1182, 7
        %v1200 = vrot.slane %v1183, 7
        %v1201 = vsel %vm751, %v1199, %v1200
        %v1202 = vrot.slane %v1184, 7
        %v1203 = vrot.slane %v1185, 7
        %v1204 = vsel %vm751, %v1202, %v1203
        %v1205 = vrot.slane %v1186, 7
        %v1206 = vrot.slane %v1187, 7
        %v1207 = vsel %vm751, %v1205, %v1206
        %v1216 = vsel %vm751, 0.0, %v1196
        %v1217 = vsel %vm751, 0.0, %v1199
        %v1218 = vsel %vm751, 0.0, %v1202
        %v1219 = vsel %vm751, 0.0, %v1205
        %v1220 = vrot.slane %v1180, 1
        %v1221 = vrot.slane %v1181, 1
        %v1222 = vsel %vm776, %v1220, %v1221
        %v1223 = vrot.slane %v1182, 1
        %v1224 = vrot.slane %v1183, 1
        %v1225 = vsel %vm776, %v1223, %v1224
        %v1226 = vrot.slane %v1184, 1
        %v1227 = vrot.slane %v1185, 1
        %v1228 = vsel %vm776, %v1226, %v1227
        %v1229 = vrot.slane %v1186, 1
        %v1230 = vrot.slane %v1187, 1
        %v1231 = vsel %vm776, %v1229, %v1230
        %v1236 = vsel %vm776, %v1221, 0.0
        %v1237 = vsel %vm776, %v1224, 0.0
        %v1238 = vsel %vm776, %v1227, 0.0
        %v1239 = vsel %vm776, %v1230, 0.0
        %1240 = vrot.lane.b32.xlu0 %v1180, 4
        %v1241 = vpop.permute.xlu0 %1240
        %1242 = vrot.lane.b32.xlu0 %v1181, 4
        %v1243 = vpop.permute.xlu0 %1242
        %1244 = vrot.lane.b32.xlu0 %v1182, 4
        %v1245 = vpop.permute.xlu0 %1244
        %1246 = vrot.lane.b32.xlu0 %v1183, 4
        %v1247 = vpop.permute.xlu0 %1246
        %1248 = vrot.lane.b32.xlu0 %v1184, 4
        %v1249 = vpop.permute.xlu0 %1248
        %1250 = vrot.lane.b32.xlu0 %v1185, 4
        %v1251 = vpop.permute.xlu0 %1250
        %1252 = vrot.lane.b32.xlu0 %v1186, 4
        %v1253 = vpop.permute.xlu0 %1252
        %1254 = vrot.lane.b32.xlu0 %v1187, 4
        %v1255 = vpop.permute.xlu0 %1254
        %1268 = vrot.lane.b32.xlu0 %v1222, 8
        %v1269 = vpop.permute.xlu0 %1268
        %1270 = vrot.lane.b32.xlu0 %v1236, 8
        %v1271 = vpop.permute.xlu0 %1270
        %1272 = vrot.lane.b32.xlu0 %v1225, 8
        %v1273 = vpop.permute.xlu0 %1272
        %1274 = vrot.lane.b32.xlu0 %v1237, 8
        %v1275 = vpop.permute.xlu0 %1274
        %1276 = vrot.lane.b32.xlu0 %v1228, 8
        %v1277 = vpop.permute.xlu0 %1276
        %1278 = vrot.lane.b32.xlu0 %v1238, 8
        %v1279 = vpop.permute.xlu0 %1278
        %1280 = vrot.lane.b32.xlu0 %v1231, 8
        %v1281 = vpop.permute.xlu0 %1280
        %1282 = vrot.lane.b32.xlu0 %v1239, 8
        %v1283 = vpop.permute.xlu0 %1282
        %v1292 = vsel %vm588, %v1216, %v1241
        %v1293 = vsel %vm588, %v1198, %v1243
        %v1294 = vsel %vm588, %v1217, %v1245
        %v1295 = vsel %vm588, %v1201, %v1247
        %v1296 = vsel %vm588, %v1218, %v1249
        %v1297 = vsel %vm588, %v1204, %v1251
        %v1298 = vsel %vm588, %v1219, %v1253
        %v1299 = vsel %vm588, %v1207, %v1255
        %v1300 = vsel %vm857, %v1292, %v1269
        %v1301 = vsel %vm857, %v1293, %v1271
        %v1302 = vsel %vm857, %v1294, %v1273
        %v1303 = vsel %vm857, %v1295, %v1275
        %v1304 = vsel %vm857, %v1296, %v1277
        %v1305 = vsel %vm857, %v1297, %v1279
        %v1306 = vsel %vm857, %v1298, %v1281
        %v1307 = vsel %vm857, %v1299, %v1283
        %v1308 = vpack.c.bf16 %v1301, %v1300
        %v1309 = vpack.c.bf16 %v1303, %v1302
        %v1310 = vpack.c.bf16 %v1305, %v1304
        %v1311 = vpack.c.bf16 %v1307, %v1306
        %s1312 = scalar_lea.vmem %s3, 16
        %v1313 = vld [vmem:[%s1312] sm:$0xf]
        %v1314 = vld [vmem:[%s1312 + $0x4] sm:$0x3]
        %v1317 = vunpack.c.l.b16 %v1313
        %v1318 = vunpack.c.l.b16 %v1314
        %v1319 = vpack.c.b16 %v1318, %v1317
        %v1321 = vsel %vm1012, %v1308, 0
        %v1324 = vsel %vm1012, %v1309, 0
        %v1327 = vsel %vm1012, %v1310, 0
        %v1330 = vsel %vm1012, %v1311, 0
        %v1333 = vsel %vm1025, %v1319, 0
        %1335 = vmatprep.subr.bf16.mxu0 0
        %1336 = vmatpush1.bf16.msra.mxu0 %v1333
        %1337 = vmatprep.subr.bf16.mxu0 0
        %1338 = vmatpush1.bf16.msra.mxu0 0
        %1339 = vmatprep.subr.bf16.mxu0 0
        %1340 = vmatpush1.bf16.msra.mxu0 0
        %1341 = vmatprep.subr.bf16.mxu0 0
        %1342 = vmatpush1.bf16.msra.mxu0 0
        %1343 = vmatprep.subr.bf16.mxu0 0
        %1344 = vmatpush1.bf16.msra.mxu0 0
        %1345 = vmatprep.subr.bf16.mxu0 0
        %1346 = vmatpush1.bf16.msra.mxu0 0
        %1347 = vmatprep.subr.bf16.mxu0 0
        %1348 = vmatpush1.bf16.msra.mxu0 0
        %1349 = vmatprep.subr.bf16.mxu0 0
        %1350 = vmatpush1.bf16.msra.mxu0 0
        %1351 = vmatprep.subr.bf16.mxu0 0
        %1352 = vmatpush1.bf16.msra.mxu0 0
        %1353 = vmatprep.subr.bf16.mxu0 0
        %1354 = vmatpush1.bf16.msra.mxu0 0
        %1355 = vmatprep.subr.bf16.mxu0 0
        %1356 = vmatpush1.bf16.msra.mxu0 0
        %1357 = vmatprep.subr.bf16.mxu0 0
        %1358 = vmatpush1.bf16.msra.mxu0 0
        %1359 = vmatprep.subr.bf16.mxu0 0
        %1360 = vmatpush1.bf16.msra.mxu0 0
        %1361 = vmatprep.subr.bf16.mxu0 0
        %1362 = vmatpush1.bf16.msra.mxu0 0
        %1363 = vmatprep.subr.bf16.mxu0 0
        %1364 = vmatpush1.bf16.msra.mxu0 0
        %1365 = vmatprep.subr.bf16.mxu0 0
        %1366 = vmatpush1.bf16.msra.mxu0 0
        %1367 = vmatprep.mubr.bf16.mxu0 0
        %1368 = vmatmul.mubr.bf16.gmra.mrb[0].mxu0 %v1321
        %v1369 = vpop.f32.mrb[0].mxu0
        %v1370 = vadd.f32 0.0, %v1369
        %v1371 = vpop.f32.mrb[0].mxu0
        %v1372 = vpop.f32.mrb[0].mxu0
        %v1373 = vadd.f32 0.0, %v1372
        %v1374 = vpop.f32.mrb[0].mxu0
        %1375 = vmatprep.mubr.bf16.mxu0 0
        %1376 = vmatmul.mubr.bf16.gmra.mrb[0].mxu0 %v1324
        %v1377 = vpop.f32.mrb[0].mxu0
        %v1378 = vadd.f32 0.0, %v1377
        %v1379 = vpop.f32.mrb[0].mxu0
        %v1380 = vpop.f32.mrb[0].mxu0
        %v1381 = vadd.f32 0.0, %v1380
        %v1382 = vpop.f32.mrb[0].mxu0
        %1383 = vmatprep.mubr.bf16.mxu0 0
        %1384 = vmatmul.mubr.bf16.gmra.mrb[0].mxu0 %v1327
        %v1385 = vpop.f32.mrb[0].mxu0
        %v1386 = vadd.f32 0.0, %v1385
        %v1387 = vpop.f32.mrb[0].mxu0
        %v1388 = vpop.f32.mrb[0].mxu0
        %v1389 = vadd.f32 0.0, %v1388
        %v1390 = vpop.f32.mrb[0].mxu0
        %1391 = vmatprep.mubr.bf16.mxu0 0
        %1392 = vmatmul.mubr.bf16.gmra.mrb[0].mxu0 %v1330
        %v1393 = vpop.f32.mrb[0].mxu0
        %v1394 = vadd.f32 0.0, %v1393
        %v1395 = vpop.f32.mrb[0].mxu0
        %v1396 = vpop.f32.mrb[0].mxu0
        %v1397 = vadd.f32 0.0, %v1396
        %v1398 = vpop.f32.mrb[0].mxu0
        %1399 = vdwg.mxu0
        %v1400 = vadd.f32 %v1149, %v1370
        %v1401 = vadd.f32 %v1152, %v1373
        %v1402 = vadd.f32 %v1157, %v1378
        %v1403 = vadd.f32 %v1160, %v1381
        %v1404 = vadd.f32 %v1165, %v1386
        %v1405 = vadd.f32 %v1168, %v1389
        %v1406 = vadd.f32 %v1173, %v1394
        %v1407 = vadd.f32 %v1176, %v1397
        %v1409 = vlaneseq
        %v1410 = vshrl.u32 %v1409, 7
        %v1411 = vsub.s32 0, %v1410
        %v1412 = vrot.slane %v448, %v1411
        %v1414 = vmul.f32 %v1400, %v1412
        %v1415 = vmul.f32 %v1401, %v1412
        %v1416 = vmul.f32 %v1402, %v1412
        %v1417 = vmul.f32 %v1403, %v1412
        %v1418 = vmul.f32 %v1404, %v1412
        %v1419 = vmul.f32 %v1405, %v1412
        %v1420 = vmul.f32 %v1406, %v1412
        %v1421 = vmul.f32 %v1407, %v1412
        %v1423 = vlaneseq
        %v1424 = vshrl.u32 %v1423, 7
        %v1425 = vsub.s32 0, %v1424
        %v1426 = vrot.slane %v449, %v1425
        %v1428 = vadd.f32 %v1414, %v1426
        %v1429 = vadd.f32 %v1415, %v1426
        %v1430 = vadd.f32 %v1416, %v1426
        %v1431 = vadd.f32 %v1417, %v1426
        %v1432 = vadd.f32 %v1418, %v1426
        %v1433 = vadd.f32 %v1419, %v1426
        %v1434 = vadd.f32 %v1420, %v1426
        %v1435 = vadd.f32 %v1421, %v1426
        %v1436 = vmax.f32 %v1428, 0.0
        %v1437 = vmax.f32 %v1429, 0.0
        %v1438 = vmax.f32 %v1430, 0.0
        %v1439 = vmax.f32 %v1431, 0.0
        %v1440 = vmax.f32 %v1432, 0.0
        %v1441 = vmax.f32 %v1433, 0.0
        %v1442 = vmax.f32 %v1434, 0.0
        %v1443 = vmax.f32 %v1435, 0.0
        %v1444 = vpack.c.bf16 %v1437, %v1436
        %v1445 = vpack.c.bf16 %v1439, %v1438
        %v1446 = vpack.c.bf16 %v1441, %v1440
        %v1447 = vpack.c.bf16 %v1443, %v1442
        %v1449 = vsel %vm588, %v1444, 0
        %v1452 = vsel %vm588, %v1445, 0
        %v1455 = vsel %vm588, %v1446, 0
        %v1458 = vsel %vm588, %v1447, 0
        %vm1460 = vcmask 1041408
        %v1462 = vsel %vm1460, %v454, 0
        %1464 = vmatprep.subr.bf16.mxu0 0
        %1465 = vmatpush1.bf16.msra.mxu0 %v1462
        %1466 = vmatprep.subr.bf16.mxu0 0
        %1467 = vmatpush1.bf16.msra.mxu0 0
        %1468 = vmatprep.subr.bf16.mxu0 0
        %1469 = vmatpush1.bf16.msra.mxu0 0
        %1470 = vmatprep.subr.bf16.mxu0 0
        %1471 = vmatpush1.bf16.msra.mxu0 0
        %1472 = vmatprep.subr.bf16.mxu0 0
        %1473 = vmatpush1.bf16.msra.mxu0 0
        %1474 = vmatprep.subr.bf16.mxu0 0
        %1475 = vmatpush1.bf16.msra.mxu0 0
        %1476 = vmatprep.subr.bf16.mxu0 0
        %1477 = vmatpush1.bf16.msra.mxu0 0
        %1478 = vmatprep.subr.bf16.mxu0 0
        %1479 = vmatpush1.bf16.msra.mxu0 0
        %1480 = vmatprep.subr.bf16.mxu0 0
        %1481 = vmatpush1.bf16.msra.mxu0 0
        %1482 = vmatprep.subr.bf16.mxu0 0
        %1483 = vmatpush1.bf16.msra.mxu0 0
        %1484 = vmatprep.subr.bf16.mxu0 0
        %1485 = vmatpush1.bf16.msra.mxu0 0
        %1486 = vmatprep.subr.bf16.mxu0 0
        %1487 = vmatpush1.bf16.msra.mxu0 0
        %1488 = vmatprep.subr.bf16.mxu0 0
        %1489 = vmatpush1.bf16.msra.mxu0 0
        %1490 = vmatprep.subr.bf16.mxu0 0
        %1491 = vmatpush1.bf16.msra.mxu0 0
        %1492 = vmatprep.subr.bf16.mxu0 0
        %1493 = vmatpush1.bf16.msra.mxu0 0
        %1494 = vmatprep.subr.bf16.mxu0 0
        %1495 = vmatpush1.bf16.msra.mxu0 0
        %1496 = vmatprep.mubr.bf16.mxu0 0
        %1497 = vmatmul.mubr.bf16.gmra.mrb[0].mxu0 %v1449
        %v1498 = vpop.f32.mrb[0].mxu0
        %v1499 = vadd.f32 0.0, %v1498
        %v1500 = vpop.f32.mrb[0].mxu0
        %v1501 = vpop.f32.mrb[0].mxu0
        %v1502 = vadd.f32 0.0, %v1501
        %v1503 = vpop.f32.mrb[0].mxu0
        %1504 = vmatprep.mubr.bf16.mxu0 0
        %1505 = vmatmul.mubr.bf16.gmra.mrb[0].mxu0 %v1452
        %v1506 = vpop.f32.mrb[0].mxu0
        %v1507 = vadd.f32 0.0, %v1506
        %v1508 = vpop.f32.mrb[0].mxu0
        %v1509 = vpop.f32.mrb[0].mxu0
        %v1510 = vadd.f32 0.0, %v1509
        %v1511 = vpop.f32.mrb[0].mxu0
        %1512 = vmatprep.mubr.bf16.mxu0 0
        %1513 = vmatmul.mubr.bf16.gmra.mrb[0].mxu0 %v1455
        %v1514 = vpop.f32.mrb[0].mxu0
        %v1515 = vadd.f32 0.0, %v1514
        %v1516 = vpop.f32.mrb[0].mxu0
        %v1517 = vpop.f32.mrb[0].mxu0
        %v1518 = vadd.f32 0.0, %v1517
        %v1519 = vpop.f32.mrb[0].mxu0
        %1520 = vmatprep.mubr.bf16.mxu0 0
        %1521 = vmatmul.mubr.bf16.gmra.mrb[0].mxu0 %v1458
        %v1522 = vpop.f32.mrb[0].mxu0
        %v1523 = vadd.f32 0.0, %v1522
        %v1524 = vpop.f32.mrb[0].mxu0
        %v1525 = vpop.f32.mrb[0].mxu0
        %v1526 = vadd.f32 0.0, %v1525
        %v1527 = vpop.f32.mrb[0].mxu0
        %1528 = vdwg.mxu0
        %v1530 = vlaneseq
        %v1531 = vshrl.u32 %v1530, 7
        %v1532 = vsub.s32 0, %v1531
        %v1533 = vrot.slane %v450, %v1532
        %v1535 = vmul.f32 %v1499, %v1533
        %v1536 = vmul.f32 %v1502, %v1533
        %v1537 = vmul.f32 %v1507, %v1533
        %v1538 = vmul.f32 %v1510, %v1533
        %v1539 = vmul.f32 %v1515, %v1533
        %v1540 = vmul.f32 %v1518, %v1533
        %v1541 = vmul.f32 %v1523, %v1533
        %v1542 = vmul.f32 %v1526, %v1533
        %v1544 = vlaneseq
        %v1545 = vshrl.u32 %v1544, 7
        %v1546 = vsub.s32 0, %v1545
        %v1547 = vrot.slane %v451, %v1546
        %v1549 = vadd.f32 %v1535, %v1547
        %v1550 = vadd.f32 %v1536, %v1547
        %v1551 = vadd.f32 %v1537, %v1547
        %v1552 = vadd.f32 %v1538, %v1547
        %v1553 = vadd.f32 %v1539, %v1547
        %v1554 = vadd.f32 %v1540, %v1547
        %v1555 = vadd.f32 %v1541, %v1547
        %v1556 = vadd.f32 %v1542, %v1547
        %v1557 = vadd.f32 %v1549, %v455
        %v1558 = vadd.f32 %v1550, %v456
        %v1559 = vadd.f32 %v1551, %v457
        %v1560 = vadd.f32 %v1552, %v458
        %v1561 = vadd.f32 %v1553, %v459
        %v1562 = vadd.f32 %v1554, %v460
        %v1563 = vadd.f32 %v1555, %v461
        %v1564 = vadd.f32 %v1556, %v462
        %v1565 = vmax.f32 %v1557, 0.0
        %v1566 = vmax.f32 %v1558, 0.0
        %v1567 = vmax.f32 %v1559, 0.0
        %v1568 = vmax.f32 %v1560, 0.0
        %v1569 = vmax.f32 %v1561, 0.0
        %v1570 = vmax.f32 %v1562, 0.0
        %v1571 = vmax.f32 %v1563, 0.0
        %v1572 = vmax.f32 %v1564, 0.0
        %1573 = vst.msk [vmem:[%s397] sm:$0xff] %vm473, %v1565
        %1574 = vst.msk [vmem:[%s397 + $0x8] sm:$0xff] %vm473, %v1566
        %1575 = vst.msk [vmem:[%s397 + $0x10] sm:$0xff] %vm473, %v1567
        %1576 = vst.msk [vmem:[%s397 + $0x18] sm:$0xff] %vm473, %v1568
        %1577 = vst.msk [vmem:[%s397 + $0x20] sm:$0xff] %vm473, %v1569
        %1578 = vst.msk [vmem:[%s397 + $0x28] sm:$0xff] %vm473, %v1570
        %1579 = vst.msk [vmem:[%s397 + $0x30] sm:$0xff] %vm473, %v1571
        %1580 = vst.msk [vmem:[%s397 + $0x38] sm:$0xff] %vm473, %v1572
        %s1581 = sand.u32 %s267, 1
        %s1582 = scalar_lea.sflag [#allocation7], %s1581
        %s1583 = sand.u32 %s267, 1
        %s1584 = smul.addr %s1583, 64
        %s1585 = scalar_lea.vmem [#allocation8], %s1584
        // Predicated region
        $region97: #{tpu_custom_call.1} parent=59 // pred_check
          %p1586 = pneg %p277
        $region98: #{tpu_custom_call.1} parent=59 // pred_check_branch
          %1588 = sbr.rel (%p1586) target = $region100
        $region99: #{tpu_custom_call.1} parent=59 // pred_region
          %s1589 = smul.u32 4, %s33
          %s1591 = ssub.s32 1024, 1024
          %1592 = vsyncadd %s1582, %s1591
          %s1593 = smul.addr %s1589, 2
          %s1594 = smul.addr %s32, 32
          %s1595 = sadd.s32 %s1593, %s1594
          %s1596 = smul.addr %s1595, 128
          %s1597 = scalar_lea.hbm %s11, %s1596
          %s1598 = sshll.u32 %s1585, 4
          %s1599 = int_to_ptr.vmem [resolvable:$true] %s1598
          %1604 = dma.vmem_to_hbm [thread:$0]  %s1599, 1024, %s1597, %s1582, 128, 128, 8
        $region100: #{tpu_custom_call.1} parent=59 // pred_fallthru
          _
      $region60: #{tpu_custom_call.1} parent=5 // pred_fallthru
        _
      %p1605 = scmp.le.s32.totalorder 2, %s23
      // Predicated region
      $region101: #{tpu_custom_call.1} parent=5 // pred_check
        %p1606 = pneg %p1605
      $region102: #{tpu_custom_call.1} parent=5 // pred_check_branch
        %1608 = sbr.rel (%p1606) target = $region104
      $region103: #{tpu_custom_call.1} parent=5 // pred_region
        %s1609 = ssub.s32 %s23, 2
        // Predicated region
        $region105: #{tpu_custom_call.1} parent=103 // pred_check
          %p1610 = pneg %p283
        $region106: #{tpu_custom_call.1} parent=103 // pred_check_branch
          %1612 = sbr.rel (%p1610) target = $region108
        $region107: #{tpu_custom_call.1} parent=103 // pred_region
          %s1613 = sand.u32 %s268, 1
          %s1614 = scalar_lea.sflag [#allocation7], %s1613
          %s1615 = sand.u32 %s268, 1
          %s1616 = smul.addr %s1615, 64
          %s1617 = scalar_lea.vmem [#allocation8], %s1616
          %1618 = dma.done %s1614, 1024
        $region108: #{tpu_custom_call.1} parent=103 // pred_fallthru
          _
      $region104: #{tpu_custom_call.1} parent=5 // pred_fallthru
        _
    $region6: #{tpu_custom_call.1} parent=1 // loop_footer
      %s27 = sadd.s32 1, %s23
    $region7: #{tpu_custom_call.1} parent=1 // loop_footer_branch
      %22 = sbr.rel target = $region3
    $region8: #{tpu_custom_call.1} parent=1 // loop_exit
      _
    %1619 = vsyncpa [#allocation6], 1
    %s1620 = scalar_lea.sflag [#allocation6], 1
    %1621 = vsyncpa %s1620, 1
    %1622 = vsyncpa [#allocation7], 1
    %s1623 = scalar_lea.sflag [#allocation7], 1
    %1624 = vsyncpa %s1623, 1
  %1625 = vsyncmov [#allocation4]
  %s1626 = vpop.sfrf %1625
  %p1627 = scmp.eq.s32.totalorder %s1626, 0
  %p1628 = pneg %p1627
  %1630 = shalt.err (%p1628)
  %s1631 = scalar_lea.sflag [#allocation4], 1
  %1632 = vsyncmov %s1631
  %s1633 = vpop.sfrf %1632
  %p1634 = scmp.eq.s32.totalorder %s1633, 0
  %p1635 = pneg %p1634
  %1637 = shalt.err (%p1635)

</llo_original>
